<compile_context>
chip_gen: v7x
topology: tpu7x:2x2x1
jax: 0.10.0
libtpu: 0.0.40
codegen_flags: <defaults>
</compile_context>

<pallas_src>
import jax
import jax.numpy as jnp
from jax.experimental import pallas as pl
from jax.experimental.pallas import tpu as pltpu


def _round_up(n, m):
    return ((n + m - 1) // m) * m


def _is_v5e():
    try:
        kind = jax.devices()[0].device_kind.lower()
    except Exception:
        return False
    return ("v5 lite" in kind) or ("v5e" in kind) or ("v5litepod" in kind)


# ---------------------------------------------------------------------------
# Fused Pallas kernel: whole forward for one tile of samples (rows)
# ---------------------------------------------------------------------------

def _make_fused_kernel(split_chunks):
    """split_chunks: None (fused 256-wide block-diag linears, v6e/v7x) or a
    static tuple of (start, size) 128-aligned diagonal chunks (v5e)."""
    f32 = jnp.float32
    bf16 = jnp.bfloat16

    def kernel(x_ref, w1_ref, b1_ref, w2_ref, b2_ref,
               w3_ref, b3_ref, w4_ref, b4_ref, w5_ref, b5_ref, out_ref):
        # conv1 (1x1) + ReLU : (TB, H*W*Cin) @ (H*W*Cin, H*W*64)   [bf16 MXU]
        xb = x_ref[...].astype(bf16)
        y = jnp.dot(xb, w1_ref[...], preferred_element_type=f32)
        y = jnp.maximum(y + b1_ref[...], 0.0)

        # conv2 (1 x items) + ReLU; output columns already in torch-raw-reshape
        # order (flat index c*(players-1) + h).
        z = jnp.dot(y.astype(bf16), w2_ref[...], preferred_element_type=f32)
        z = jnp.maximum(z + b2_ref[...], 0.0)

        def block_diag_linear(v_bf16, w_ref, b_ref):
            # Linear(64,64) applied to each reshaped (players-1) row.
            if split_chunks is None:
                o = jnp.dot(v_bf16, w_ref[...], preferred_element_type=f32)
            else:
                # v5e: only the diagonal 128x128 tiles are non-zero.
                o = jnp.concatenate(
                    [jnp.dot(v_bf16[:, s:s + n],
                             w_ref[pl.ds(s, n), pl.ds(s, n)],
                             preferred_element_type=f32)
                     for s, n in split_chunks],
                    axis=-1)
            return jnp.maximum(o + b_ref[...], 0.0)

        u = block_diag_linear(z.astype(bf16), w3_ref, b3_ref)
        u = block_diag_linear(u.astype(bf16), w4_ref, b4_ref)

        # sum over (players-1) + decoder Linear(64,1), fused into one matmul
        out = jnp.dot(u.astype(bf16), w5_ref[...], preferred_element_type=f32)
        out_ref[...] = out + b5_ref[0, 0]

    return kernel


# ---------------------------------------------------------------------------
# Weight packing (tiny tensors, built once per call under jit)
# ---------------------------------------------------------------------------

def _pack_params(params, players, items):
    (W1, b1, W2, b2, W3, b3, W4, b4, W5, b5) = params
    H = players - 1
    Wd = items
    C_in = 2 * items + 1
    P = H * Wd                              # number of spatial positions
    f32 = jnp.float32
    bf16 = jnp.bfloat16

    eye_p = jnp.eye(P, dtype=f32)
    eye_h = jnp.eye(H, dtype=f32)

    # conv1 (1x1): block-diagonal over the H*W spatial positions.
    # a_pack[c*P + p, q*64 + m] = W1[m, c] * (p == q)
    w1_2d = W1[:, :, 0, 0]                                   # (64, Cin)  [m, c]
    a_pack = jnp.einsum('mc,pq->cpqm', w1_2d, eye_p)
    a_pack = a_pack.reshape(C_in * P, P * 64)
    b1_pack = jnp.tile(b1, P).reshape(1, P * 64)

    # conv2 (1 x items): block-diagonal over H; output column index = c*H + h,
    # i.e. the NCHW C-order flat index == torch.reshape(-1, players-1, 64).
    # b_pack[(h*Wd + j)*64 + m, c*H + k] = W2[c, m, 0, j] * (h == k)
    w2_3d = W2[:, :, 0, :]                                   # (64c, 64m, Wd)
    b_pack = jnp.einsum('cmj,hk->hjmck', w2_3d, eye_h)
    b_pack = b_pack.reshape(P * 64, 64 * H)
    b2_pack = jnp.repeat(b2, H).reshape(1, 64 * H)

    # linear layers: block-diagonal over the (players-1) reshaped rows.
    # w3_pack[p*64 + q, r*64 + k] = W3[k, q] * (p == r)
    w3_pack = jnp.einsum('kq,pr->pqrk', W3, eye_h).reshape(H * 64, H * 64)
    b3_pack = jnp.tile(b3, H).reshape(1, H * 64)
    w4_pack = jnp.einsum('kq,pr->pqrk', W4, eye_h).reshape(H * 64, H * 64)
    b4_pack = jnp.tile(b4, H).reshape(1, H * 64)

    # sum over (players-1) rows + decoder Linear(64,1): tile W5 row-wise.
    w5_pack = jnp.tile(W5.reshape(-1), H).reshape(H * 64, 1)
    b5_pack = b5.reshape(1, 1)

    # bf16 MXU inputs (f32 accumulation in-kernel); biases stay f32.
    return (a_pack.astype(bf16), b1_pack, b_pack.astype(bf16), b2_pack,
            w3_pack.astype(bf16), b3_pack, w4_pack.astype(bf16), b4_pack,
            w5_pack.astype(bf16), b5_pack)


# ---------------------------------------------------------------------------
# Wrapper
# ---------------------------------------------------------------------------

def auction_net_forward(x, params, *, players, items, tile_b=1024):
    """x: (B, items*2+1, players-1, items) float32, PyTorch NCHW layout."""
    B, C_in, H, Wd = x.shape
    assert C_in == 2 * items + 1 and H == players - 1 and Wd == items
    K0 = C_in * H * Wd          # packed input width
    K1 = H * Wd * 64            # conv1 output width
    K2 = H * 64                 # conv2 / linear width

    packed = _pack_params(params, players, items)
    (a_pack, b1_pack, b_pack, b2_pack,
     w3_pack, b3_pack, w4_pack, b4_pack, w5_pack, b5_pack) = packed

    x_rows = x.reshape(B, K0)   # metadata-only NCHW flatten, no data movement

    # --- batch tiling ------------------------------------------------------
    # Balanced tiles of ~tile_b rows (multiple of 8).  For B > 1024 we always
    # produce >= 2 grid steps so v7x's two TensorCores both get work under
    # dimension_semantics=("parallel",).  Tiny batches are padded to 8 rows
    # (one full sublane tile) to avoid degenerate masked codegen.
    n_tiles = max(1, -(-B // max(int(tile_b), 8)))
    if n_tiles == 1 and B > 1024:
        n_tiles = 2
    tb = max(8, _round_up(-(-B // n_tiles), 8))
    b_pad = n_tiles * tb
    if b_pad != B:
        x_rows = jnp.pad(x_rows, ((0, b_pad - B), (0, 0)))

    # --- resident packed-weight BlockSpecs ---------------------------------
    # v7x VMEM guard: when the (H*W)^2-scaling packed weights get large, keep
    # them single-buffered (their block never changes across the grid).  Not
    # triggered at small model sizes.
    weight_bytes = sum(int(a.size) * a.dtype.itemsize for a in packed)
    single_buffer_weights = (weight_bytes * 2 > 16 * 1024 * 1024
                             and hasattr(pl, "Buffered"))
    # TODO(synk): for very large (players, items) a_pack should additionally be
    # tiled over a contraction grid axis instead of kept fully resident.

    def resident(shape):        # whole-array VMEM block, constant across grid
        if single_buffer_weights:
            return pl.BlockSpec(shape, lambda i: (0, 0),
                                pipeline_mode=pl.Buffered(1))
        return pl.BlockSpec(shape, lambda i: (0, 0))

    # v5e: its MXU is 128x128, so split the block-diagonal linear matmuls into
    # 128-aligned diagonal chunks (off-diagonal 128-tiles are zero).
    if _is_v5e() and K2 > 128:
        split_chunks = tuple((s, min(128, K2 - s)) for s in range(0, K2, 128))
    else:
        split_chunks = None

    kernel = _make_fused_kernel(split_chunks)

    out = pl.pallas_call(
        kernel,
        out_shape=jax.ShapeDtypeStruct((b_pad, 1), jnp.float32),
        grid=(n_tiles,),
        in_specs=[
            pl.BlockSpec((tb, K0), lambda i: (i, 0)),           # x tile (streamed)
            resident((K0, K1)), resident((1, K1)),              # conv1 packed
            resident((K1, K2)), resident((1, K2)),              # conv2 packed
            resident((K2, K2)), resident((1, K2)),              # linear1 packed
            resident((K2, K2)), resident((1, K2)),              # linear2 packed
            resident((K2, 1)),                                  # sum+decoder packed
            pl.BlockSpec(memory_space=pltpu.MemorySpace.SMEM),  # b5 scalar
        ],
        out_specs=pl.BlockSpec((tb, 1), lambda i: (i, 0)),
        compiler_params=pltpu.CompilerParams(
            dimension_semantics=("parallel",),      # both TCs on v7x
            vmem_limit_bytes=48 * 1024 * 1024),     # > scoped default, < v7x phys
    )(x_rows, a_pack, b1_pack, b_pack, b2_pack,
      w3_pack, b3_pack, w4_pack, b4_pack, w5_pack, b5_pack)

    return out[:B]


# ---------------------------------------------------------------------------
# Pure-JAX f32 reference (mirrors the PyTorch forward exactly)
# ---------------------------------------------------------------------------

def auction_net_reference(x, params):
    B, C_in, H, Wd = x.shape
    (W1, b1, W2, b2, W3, b3, W4, b4, W5, b5) = params
    y = jnp.einsum('bchw,oc->bohw', x, W1[:, :, 0, 0]) + b1[None, :, None, None]
    y = jnp.maximum(y, 0.0)
    z = jnp.einsum('bchj,ocj->boh', y, W2[:, :, 0, :]) + b2[None, :, None]
    z = jnp.maximum(z, 0.0)                 # (B, 64, H)  == (B, 64, H, 1) squeezed
    r = z.reshape(B, H, 64)                 # torch.reshape(x, (-1, players-1, 64))
    u = jnp.maximum(r @ W3.T + b3, 0.0)
    u = jnp.maximum(u @ W4.T + b4, 0.0)
    s = jnp.sum(u, axis=1)
    return s @ W5.T + b5


# ---------------------------------------------------------------------------

def init_params(key, players, items):
    C_in = items * 2 + 1
    ks = jax.random.split(key, 10)
    scale = 0.1
    W1 = scale * jax.random.normal(ks[0], (64, C_in, 1, 1), jnp.float32)
    b1 = scale * jax.random.normal(ks[1], (64,), jnp.float32)
    W2 = scale * jax.random.normal(ks[2], (64, 64, 1, items), jnp.float32)
    b2 = scale * jax.random.normal(ks[3], (64,), jnp.float32)
    W3 = scale * jax.random.normal(ks[4], (64, 64), jnp.float32)
    b3 = scale * jax.random.normal(ks[5], (64,), jnp.float32)
    W4 = scale * jax.random.normal(ks[6], (64, 64), jnp.float32)
    b4 = scale * jax.random.normal(ks[7], (64,), jnp.float32)
    W5 = scale * jax.random.normal(ks[8], (1, 64), jnp.float32)
    b5 = scale * jax.random.normal(ks[9], (1,), jnp.float32)
    return (W1, b1, W2, b2, W3, b3, W4, b4, W5, b5)


if __name__ == "__main__":
    players, items = 5, 4            # -> C_in = 9, H = players-1 = 4, W = items = 4
    C_in, H, Wd = items * 2 + 1, players - 1, items

    key = jax.random.PRNGKey(0)
    kp, kx1, kx2, kx3 = jax.random.split(key, 4)
    params = init_params(kp, players, items)

    fwd = jax.jit(auction_net_forward,
                  static_argnames=("players", "items", "tile_b"))

    # bf16 MXU inputs with f32 accumulation -> loose tolerance vs f32 reference
    # (structural bugs would produce O(0.3+) errors, bf16 rounding ~1e-2).
    ATOL, RTOL = 5e-2, 5e-2

    # 1) tiny batch -> single block, padded up to 8 rows
    B1 = 2
    x1 = jax.random.normal(kx1, (B1, C_in, H, Wd), jnp.float32)
    out1 = jax.block_until_ready(fwd(x1, params, players=players, items=items))
    ref1 = auction_net_reference(x1, params)
    assert out1.shape == (B1, 1)
    assert jnp.allclose(out1, ref1, atol=ATOL, rtol=RTOL), (out1, ref1)

    # 2) batch exercising the tiled grid path (grid=4) with zero-padding
    B2 = 50
    x2 = jax.random.normal(kx2, (B2, C_in, H, Wd), jnp.float32)
    out2 = jax.block_until_ready(
        fwd(x2, params, players=players, items=items, tile_b=16))
    ref2 = auction_net_reference(x2, params)
    assert out2.shape == (B2, 1)
    assert jnp.allclose(out2, ref2, atol=ATOL, rtol=RTOL), (out2, ref2)

    # 3) mid-size batch -> balanced >=2-tile split (v7x megacore path)
    B3 = 1037
    x3 = jax.random.normal(kx3, (B3, C_in, H, Wd), jnp.float32)
    out3 = jax.block_until_ready(fwd(x3, params, players=players, items=items))
    ref3 = auction_net_reference(x3, params)
    assert out3.shape == (B3, 1)
    assert jnp.allclose(out3, ref3, atol=ATOL, rtol=RTOL)

    print("KERNEL_OK")
</pallas_src>

<mosaic_0001>
module attributes {stable_mosaic.version = 11 : i64} {
  func.func @kernel(%arg0: i32, %arg1: memref<8x144xf32, #tpu.memory_space<vmem>>, %arg2: memref<144x1024xbf16, #tpu.memory_space<vmem>>, %arg3: memref<1x1024xf32, #tpu.memory_space<vmem>>, %arg4: memref<1024x256xbf16, #tpu.memory_space<vmem>>, %arg5: memref<1x256xf32, #tpu.memory_space<vmem>>, %arg6: memref<256x256xbf16, #tpu.memory_space<vmem>>, %arg7: memref<1x256xf32, #tpu.memory_space<vmem>>, %arg8: memref<256x256xbf16, #tpu.memory_space<vmem>>, %arg9: memref<1x256xf32, #tpu.memory_space<vmem>>, %arg10: memref<256x1xbf16, #tpu.memory_space<vmem>>, %arg11: memref<1x1xf32, #tpu.memory_space<smem>>, %arg12: memref<8x1xf32, #tpu.memory_space<vmem>>) attributes {dimension_semantics = [#tpu.dimension_semantics<parallel>], iteration_bounds = array<i64: 1>, scalar_prefetch = 0 : i64, scratch_operands = 0 : i64, tpu.core_type = #tpu.core_type<tc>, window_params = [{transform_indices = @transform_0, window_bounds = array<i64: 8, 144>}, {pipeline_mode = #tpu.pipeline_mode<synchronous>, transform_indices = @transform_1, window_bounds = array<i64: 144, 1024>}, {pipeline_mode = #tpu.pipeline_mode<synchronous>, transform_indices = @transform_2, window_bounds = array<i64: 1, 1024>}, {pipeline_mode = #tpu.pipeline_mode<synchronous>, transform_indices = @transform_3, window_bounds = array<i64: 1024, 256>}, {pipeline_mode = #tpu.pipeline_mode<synchronous>, transform_indices = @transform_4, window_bounds = array<i64: 1, 256>}, {pipeline_mode = #tpu.pipeline_mode<synchronous>, transform_indices = @transform_5, window_bounds = array<i64: 256, 256>}, {pipeline_mode = #tpu.pipeline_mode<synchronous>, transform_indices = @transform_6, window_bounds = array<i64: 1, 256>}, {pipeline_mode = #tpu.pipeline_mode<synchronous>, transform_indices = @transform_7, window_bounds = array<i64: 256, 256>}, {pipeline_mode = #tpu.pipeline_mode<synchronous>, transform_indices = @transform_8, window_bounds = array<i64: 1, 256>}, {pipeline_mode = #tpu.pipeline_mode<synchronous>, transform_indices = @transform_9, window_bounds = array<i64: 256, 1>}, {transform_indices = @transform_10, window_bounds = array<i64: 1, 1>}, {transform_indices = @transform_11, window_bounds = array<i64: 8, 1>}]} {
    %c0 = arith.constant 0 : index
    %c0_0 = arith.constant 0 : index
    %0 = vector.load %arg1[%c0, %c0_0] : memref<8x144xf32, #tpu.memory_space<vmem>>, vector<8x144xf32>
    %1 = arith.truncf %0 : vector<8x144xf32> to vector<8x144xbf16>
    %c0_1 = arith.constant 0 : index
    %c0_2 = arith.constant 0 : index
    %2 = vector.load %arg2[%c0_1, %c0_2] : memref<144x1024xbf16, #tpu.memory_space<vmem>>, vector<144x1024xbf16>
    %cst = arith.constant dense<0.000000e+00> : vector<8x1024xf32>
    %3 = tpu.matmul %1, %2, %cst {dimension_numbers = #tpu.dot_dimension_numbers<[1], [0], [0], [1], [0, 0, 1, 1], [], []>} : vector<8x144xbf16>, vector<144x1024xbf16>, vector<8x1024xf32> -> vector<8x1024xf32>
    %c0_3 = arith.constant 0 : index
    %c0_4 = arith.constant 0 : index
    %4 = vector.load %arg3[%c0_3, %c0_4] : memref<1x1024xf32, #tpu.memory_space<vmem>>, vector<1x1024xf32>
    %5 = vector.broadcast %4 : vector<1x1024xf32> to vector<8x1024xf32>
    %6 = arith.addf %3, %5 : vector<8x1024xf32>
    %cst_5 = arith.constant 0.000000e+00 : f32
    %7 = vector.broadcast %cst_5 : f32 to vector<8x1024xf32>
    %8 = arith.maximumf %6, %7 : vector<8x1024xf32>
    %9 = arith.truncf %8 : vector<8x1024xf32> to vector<8x1024xbf16>
    %c0_6 = arith.constant 0 : index
    %c0_7 = arith.constant 0 : index
    %10 = vector.load %arg4[%c0_6, %c0_7] : memref<1024x256xbf16, #tpu.memory_space<vmem>>, vector<1024x256xbf16>
    %cst_8 = arith.constant dense<0.000000e+00> : vector<8x256xf32>
    %11 = tpu.matmul %9, %10, %cst_8 {dimension_numbers = #tpu.dot_dimension_numbers<[1], [0], [0], [1], [0, 0, 1, 1], [], []>} : vector<8x1024xbf16>, vector<1024x256xbf16>, vector<8x256xf32> -> vector<8x256xf32>
    %c0_9 = arith.constant 0 : index
    %c0_10 = arith.constant 0 : index
    %12 = vector.load %arg5[%c0_9, %c0_10] : memref<1x256xf32, #tpu.memory_space<vmem>>, vector<1x256xf32>
    %13 = vector.broadcast %12 : vector<1x256xf32> to vector<8x256xf32>
    %14 = arith.addf %11, %13 : vector<8x256xf32>
    %cst_11 = arith.constant 0.000000e+00 : f32
    %15 = vector.broadcast %cst_11 : f32 to vector<8x256xf32>
    %16 = arith.maximumf %14, %15 : vector<8x256xf32>
    %17 = arith.truncf %16 : vector<8x256xf32> to vector<8x256xbf16>
    %c0_12 = arith.constant 0 : index
    %c0_13 = arith.constant 0 : index
    %18 = vector.load %arg6[%c0_12, %c0_13] : memref<256x256xbf16, #tpu.memory_space<vmem>>, vector<256x256xbf16>
    %cst_14 = arith.constant dense<0.000000e+00> : vector<8x256xf32>
    %19 = tpu.matmul %17, %18, %cst_14 {dimension_numbers = #tpu.dot_dimension_numbers<[1], [0], [0], [1], [0, 0, 1, 1], [], []>} : vector<8x256xbf16>, vector<256x256xbf16>, vector<8x256xf32> -> vector<8x256xf32>
    %c0_15 = arith.constant 0 : index
    %c0_16 = arith.constant 0 : index
    %20 = vector.load %arg7[%c0_15, %c0_16] : memref<1x256xf32, #tpu.memory_space<vmem>>, vector<1x256xf32>
    %21 = vector.broadcast %20 : vector<1x256xf32> to vector<8x256xf32>
    %22 = arith.addf %19, %21 : vector<8x256xf32>
    %cst_17 = arith.constant 0.000000e+00 : f32
    %23 = vector.broadcast %cst_17 : f32 to vector<8x256xf32>
    %24 = arith.maximumf %22, %23 : vector<8x256xf32>
    %25 = arith.truncf %24 : vector<8x256xf32> to vector<8x256xbf16>
    %c0_18 = arith.constant 0 : index
    %c0_19 = arith.constant 0 : index
    %26 = vector.load %arg8[%c0_18, %c0_19] : memref<256x256xbf16, #tpu.memory_space<vmem>>, vector<256x256xbf16>
    %cst_20 = arith.constant dense<0.000000e+00> : vector<8x256xf32>
    %27 = tpu.matmul %25, %26, %cst_20 {dimension_numbers = #tpu.dot_dimension_numbers<[1], [0], [0], [1], [0, 0, 1, 1], [], []>} : vector<8x256xbf16>, vector<256x256xbf16>, vector<8x256xf32> -> vector<8x256xf32>
    %c0_21 = arith.constant 0 : index
    %c0_22 = arith.constant 0 : index
    %28 = vector.load %arg9[%c0_21, %c0_22] : memref<1x256xf32, #tpu.memory_space<vmem>>, vector<1x256xf32>
    %29 = vector.broadcast %28 : vector<1x256xf32> to vector<8x256xf32>
    %30 = arith.addf %27, %29 : vector<8x256xf32>
    %cst_23 = arith.constant 0.000000e+00 : f32
    %31 = vector.broadcast %cst_23 : f32 to vector<8x256xf32>
    %32 = arith.maximumf %30, %31 : vector<8x256xf32>
    %33 = arith.truncf %32 : vector<8x256xf32> to vector<8x256xbf16>
    %c0_24 = arith.constant 0 : index
    %c0_25 = arith.constant 0 : index
    %34 = vector.load %arg10[%c0_24, %c0_25] : memref<256x1xbf16, #tpu.memory_space<vmem>>, vector<256x1xbf16>
    %cst_26 = arith.constant dense<0.000000e+00> : vector<8x1xf32>
    %35 = tpu.matmul %33, %34, %cst_26 {dimension_numbers = #tpu.dot_dimension_numbers<[1], [0], [0], [1], [0, 0, 1, 1], [], []>} : vector<8x256xbf16>, vector<256x1xbf16>, vector<8x1xf32> -> vector<8x1xf32>
    %c0_27 = arith.constant 0 : index
    %c0_28 = arith.constant 0 : index
    %36 = memref.load %arg11[%c0_27, %c0_28] : memref<1x1xf32, #tpu.memory_space<smem>>
    %37 = vector.broadcast %36 : f32 to vector<8x1xf32>
    %38 = arith.addf %35, %37 : vector<8x1xf32>
    %c0_29 = arith.constant 0 : index
    %c0_30 = arith.constant 0 : index
    %39 = vector.load %arg12[%c0_29, %c0_30] : memref<8x1xf32, #tpu.memory_space<vmem>>, vector<8x1xf32>
    tpu.vector_store %arg12[%c0_29, %c0_30], %38 {strides = array<i32>} : memref<8x1xf32, #tpu.memory_space<vmem>>, vector<8x1xf32>,
    return
  }
  func.func @transform_0(%arg0: i32) -> (i32, i32) {
    %c0_i32 = arith.constant 0 : i32
    %c0_i32_0 = arith.constant 0 : i32
    return %arg0, %c0_i32 : i32, i32
  }
  func.func @transform_1(%arg0: i32) -> (i32, i32) {
    %c0_i32 = arith.constant 0 : i32
    %c0_i32_0 = arith.constant 0 : i32
    %c0_i32_1 = arith.constant 0 : i32
    return %c0_i32, %c0_i32_0 : i32, i32
  }
  func.func @transform_2(%arg0: i32) -> (i32, i32) {
    %c0_i32 = arith.constant 0 : i32
    %c0_i32_0 = arith.constant 0 : i32
    %c0_i32_1 = arith.constant 0 : i32
    return %c0_i32, %c0_i32_0 : i32, i32
  }
  func.func @transform_3(%arg0: i32) -> (i32, i32) {
    %c0_i32 = arith.constant 0 : i32
    %c0_i32_0 = arith.constant 0 : i32
    %c0_i32_1 = arith.constant 0 : i32
    return %c0_i32, %c0_i32_0 : i32, i32
  }
  func.func @transform_4(%arg0: i32) -> (i32, i32) {
    %c0_i32 = arith.constant 0 : i32
    %c0_i32_0 = arith.constant 0 : i32
    %c0_i32_1 = arith.constant 0 : i32
    return %c0_i32, %c0_i32_0 : i32, i32
  }
  func.func @transform_5(%arg0: i32) -> (i32, i32) {
    %c0_i32 = arith.constant 0 : i32
    %c0_i32_0 = arith.constant 0 : i32
    %c0_i32_1 = arith.constant 0 : i32
    return %c0_i32, %c0_i32_0 : i32, i32
  }
  func.func @transform_6(%arg0: i32) -> (i32, i32) {
    %c0_i32 = arith.constant 0 : i32
    %c0_i32_0 = arith.constant 0 : i32
    %c0_i32_1 = arith.constant 0 : i32
    return %c0_i32, %c0_i32_0 : i32, i32
  }
  func.func @transform_7(%arg0: i32) -> (i32, i32) {
    %c0_i32 = arith.constant 0 : i32
    %c0_i32_0 = arith.constant 0 : i32
    %c0_i32_1 = arith.constant 0 : i32
    return %c0_i32, %c0_i32_0 : i32, i32
  }
  func.func @transform_8(%arg0: i32) -> (i32, i32) {
    %c0_i32 = arith.constant 0 : i32
    %c0_i32_0 = arith.constant 0 : i32
    %c0_i32_1 = arith.constant 0 : i32
    return %c0_i32, %c0_i32_0 : i32, i32
  }
  func.func @transform_9(%arg0: i32) -> (i32, i32) {
    %c0_i32 = arith.constant 0 : i32
    %c0_i32_0 = arith.constant 0 : i32
    %c0_i32_1 = arith.constant 0 : i32
    return %c0_i32, %c0_i32_0 : i32, i32
  }
  func.func @transform_10(%arg0: i32) -> (i32, i32) {
    %c0_i32 = arith.constant 0 : i32
    %c0_i32_0 = arith.constant 0 : i32
    %c0_i32_1 = arith.constant 0 : i32
    return %c0_i32, %c0_i32_0 : i32, i32
  }
  func.func @transform_11(%arg0: i32) -> (i32, i32) {
    %c0_i32 = arith.constant 0 : i32
    %c0_i32_0 = arith.constant 0 : i32
    return %arg0, %c0_i32 : i32, i32
  }
}

</mosaic_0001>

<llo_original>
// kernel: tile.22
$region0: #{tile.22}
  #allocation0 [shape = 's32[1]{0}', space=sflag, size = 0x4, scoped, tag = 'scoped memory for tile.22']
  %s0 = inlined_call_operand.vmem [shape: f32[64], index: 0, kind: input, shape index: {}]
  %s1 = inlined_call_operand.vmem [shape: f32[16,64], index: 1, kind: output, shape index: {}]
  // Predicated region
  $region2: #{tile.22} parent=0 // pred_check
    _
  $region3: #{tile.22} parent=0 // pred_check_branch
    %3 = sbr.rel (0) target = $region5
  $region4: #{tile.22} parent=0 // pred_region
    _
  $region5: #{tile.22} parent=0 // pred_fallthru
    _
  %v4 = vld [vmem:[%s0] ss:$0 sm:$0xff]
  %5 = vst [vmem:[%s1] sm:$0xff] %v4
  %s6 = scalar_lea.vmem %s1, 8
  %7 = vst [vmem:[%s6] sm:$0xff] %v4

// kernel: tile.23
$region0: #{tile.23}
  %s0 = inlined_call_operand.vmem [shape: f32[16,64], index: 0, kind: input, shape index: {}]
  %s1 = inlined_call_operand.vmem [shape: f32[1,1024], index: 1, kind: output, shape index: {}]
  $region1: #{tile.23} parent=0
    #allocation0 [shape = 'u8[32768]{0}', space=vmem, size = 0x8000, scoped, tag = 'scoped mem for output reshape']
    %v2 = vld [vmem:[%s0] ss:$2 sm:$0xff]
    %vm3 = vcmask 523264
    %4 = vst.msk [vmem:[#allocation0] ss:$8 sm:$0xf] %vm3, %v2
    %5 = vst.msk [vmem:[#allocation0] ss:$8 sm:$0xf0] %vm3, %v2
    %s6 = scalar_lea.vmem %s0, 1
    %v7 = vld [vmem:[%s6] ss:$2 sm:$0xff]
    %8 = vrot.lane.b32.xlu0 %v7, 64
    %v9 = vpop.permute.xlu0 %8
    %vm10 = vcmask 1048064
    %11 = vst.msk [vmem:[#allocation0] ss:$8 sm:$0xf] %vm10, %v9
    %12 = vst.msk [vmem:[#allocation0] ss:$8 sm:$0xf0] %vm10, %v9
    %s14 = sshllo.u32 0, 1
    %v16 = vld [vmem:[#allocation0] sm:%s14]
    %s17 = sshllo.u32 0, 1
    %18 = vst [vmem:[%s1] sm:%s17] %v16
    %s19 = scalar_lea.vmem [#allocation0], 8
    %v20 = vld [vmem:[%s19] sm:%s14]
    %s21 = sshllo.u32 0, 1
    %s22 = scalar_lea.vmem %s1, 1
    %23 = vst [vmem:[%s22] sm:%s21] %v20
    %s24 = scalar_lea.vmem [#allocation0], 16
    %v25 = vld [vmem:[%s24] sm:%s14]
    %s26 = sshllo.u32 0, 1
    %s27 = smul.addr 1, 2
    %s28 = scalar_lea.vmem %s1, %s27
    %29 = vst [vmem:[%s28] sm:%s26] %v25
    %s30 = scalar_lea.vmem [#allocation0], 24
    %v31 = vld [vmem:[%s30] sm:%s14]
    %s32 = sshllo.u32 0, 1
    %s33 = smul.addr 1, 3
    %s34 = scalar_lea.vmem %s1, %s33
    %35 = vst [vmem:[%s34] sm:%s32] %v31
    %s36 = scalar_lea.vmem [#allocation0], 32
    %v37 = vld [vmem:[%s36] sm:%s14]
    %s38 = sshllo.u32 0, 1
    %s39 = smul.addr 1, 4
    %s40 = scalar_lea.vmem %s1, %s39
    %41 = vst [vmem:[%s40] sm:%s38] %v37
    %s42 = scalar_lea.vmem [#allocation0], 40
    %v43 = vld [vmem:[%s42] sm:%s14]
    %s44 = sshllo.u32 0, 1
    %s45 = smul.addr 1, 5
    %s46 = scalar_lea.vmem %s1, %s45
    %47 = vst [vmem:[%s46] sm:%s44] %v43
    %s48 = scalar_lea.vmem [#allocation0], 48
    %v49 = vld [vmem:[%s48] sm:%s14]
    %s50 = sshllo.u32 0, 1
    %s51 = smul.addr 1, 6
    %s52 = scalar_lea.vmem %s1, %s51
    %53 = vst [vmem:[%s52] sm:%s50] %v49
    %s54 = scalar_lea.vmem [#allocation0], 56
    %v55 = vld [vmem:[%s54] sm:%s14]
    %s56 = sshllo.u32 0, 1
    %s57 = smul.addr 1, 7
    %s58 = scalar_lea.vmem %s1, %s57
    %59 = vst [vmem:[%s58] sm:%s56] %v55

// kernel: tile.27
$region0: #{tile.27}
  #allocation0 [shape = 's32[1]{0}', space=sflag, size = 0x4, scoped, tag = 'scoped memory for tile.27']
  %s0 = inlined_call_operand.vmem [shape: f32[64], index: 0, kind: input, shape index: {}]
  %s1 = inlined_call_operand.vmem [shape: f32[4,64], index: 1, kind: output, shape index: {}]
  // Predicated region
  $region2: #{tile.27} parent=0 // pred_check
    _
  $region3: #{tile.27} parent=0 // pred_check_branch
    %3 = sbr.rel (0) target = $region5
  $region4: #{tile.27} parent=0 // pred_region
    _
  $region5: #{tile.27} parent=0 // pred_fallthru
    _
  %v4 = vld [vmem:[%s0] ss:$0 sm:$0xff]
  %5 = vst [vmem:[%s1] sm:$0xf] %v4

// kernel: tile.28
$region0: #{tile.28}
  %s0 = inlined_call_operand.vmem [shape: f32[4,64], index: 0, kind: input, shape index: {}]
  %s1 = inlined_call_operand.vmem [shape: f32[1,256], index: 1, kind: output, shape index: {}]
  $region1: #{tile.28} parent=0
    #allocation0 [shape = 'u8[8192]{0}', space=vmem, size = 0x2000, scoped, tag = 'scoped mem for output reshape']
    #allocation1 [shape = 'u8[4096]{0}', space=vmem, size = 0x1000, scoped, tag = 'scoped mem for input reshape']
    %s3 = sshllo.u32 0, 4
    %v4 = vld [vmem:[%s0] sm:%s3]
    %5 = vst [vmem:[#allocation1] sm:%s3] %v4
    %s6 = smov 3
    %v7 = vld [vmem:[#allocation1] ss:$2 sm:%s6]
    %vm8 = vcmask 523264
    %9 = vst.msk [vmem:[#allocation0] ss:$8 sm:$0x3] %vm8, %v7
    %s10 = scalar_lea.vmem [#allocation1], 1
    %s11 = smov 3
    %v12 = vld [vmem:[%s10] ss:$2 sm:%s11]
    %13 = vrot.lane.b32.xlu0 %v12, 64
    %v14 = vpop.permute.xlu0 %13
    %vm15 = vcmask 1048064
    %16 = vst.msk [vmem:[#allocation0] ss:$8 sm:$0x3] %vm15, %v14
    %s18 = sshllo.u32 0, 1
    %v20 = vld [vmem:[#allocation0] sm:%s18]
    %s21 = sshllo.u32 0, 1
    %22 = vst [vmem:[%s1] sm:%s21] %v20
    %s23 = scalar_lea.vmem [#allocation0], 8
    %v24 = vld [vmem:[%s23] sm:%s18]
    %s25 = sshllo.u32 0, 1
    %s26 = scalar_lea.vmem %s1, 1
    %27 = vst [vmem:[%s26] sm:%s25] %v24

// kernel: auction_net_forward.1
$region0: #{auction_net_forward.1}
  #allocation0 [shape = 'u32[]', space=smem, size = 0x4, offset = 0x4, fixed_abs, tag = 'smem constant byte address 0x4 - core index']
  #allocation1 [shape = 'u32[144,128]{1,0:T(1,128)}', space=vmem, size = 0x12000, scoped, tag = 'internal scratch']
  #allocation2 [shape = 'f32[1,1]{1,0:T(1,128)S(6)}', space=smem, size = 0x200, scoped, tag = 'scoped memory for auction_net_forward.1']
  %s0 = inlined_call_operand.vmem [shape: f32[8,144], index: 0, kind: input, shape index: {}]
  %s1 = inlined_call_operand.vmem [shape: bf16[144,1024], index: 1, kind: input, shape index: {}]
  %s2 = inlined_call_operand.vmem [shape: f32[1,1024], index: 2, kind: input, shape index: {}]
  %s3 = inlined_call_operand.vmem [shape: bf16[1024,256], index: 3, kind: input, shape index: {}]
  %s4 = inlined_call_operand.vmem [shape: f32[1,256], index: 4, kind: input, shape index: {}]
  %s5 = inlined_call_operand.vmem [shape: bf16[256,256], index: 5, kind: input, shape index: {}]
  %s6 = inlined_call_operand.vmem [shape: f32[1,256], index: 6, kind: input, shape index: {}]
  %s7 = inlined_call_operand.vmem [shape: bf16[256,256], index: 7, kind: input, shape index: {}]
  %s8 = inlined_call_operand.vmem [shape: f32[1,256], index: 8, kind: input, shape index: {}]
  %s9 = inlined_call_operand.vmem [shape: bf16[256,1], index: 9, kind: input, shape index: {}]
  %s10 = inlined_call_operand.<no memory space> [shape: f32[1,1], index: 10, kind: input, shape index: {}]
  %s11 = inlined_call_operand.vmem [shape: f32[8,1], index: 11, kind: output, shape index: {}]
  %s12 = sld [smem:[#allocation0]]
  $region54: #{auction_net_forward.1} parent=0
    _
  %s14 = ssub.s32 1, %s12
  %s15 = scalar_select 0, %s14, %s12
  %16 = sst [smem:[#allocation2]] %s10
  // Predicated region
  $region2: #{auction_net_forward.1} parent=0 // pred_check
    _
  $region3: #{auction_net_forward.1} parent=0 // pred_check_branch
    %18 = sbr.rel (0) target = $region5
  $region4: #{auction_net_forward.1} parent=0 // pred_region
    _
  $region5: #{auction_net_forward.1} parent=0 // pred_fallthru
    _
  // Predicated region
  $region6: #{auction_net_forward.1} parent=0 // pred_check
    _
  $region7: #{auction_net_forward.1} parent=0 // pred_check_branch
    %20 = sbr.rel (0) target = $region9
  $region8: #{auction_net_forward.1} parent=0 // pred_region
    _
  $region9: #{auction_net_forward.1} parent=0 // pred_fallthru
    _
  // Predicated region
  $region10: #{auction_net_forward.1} parent=0 // pred_check
    _
  $region11: #{auction_net_forward.1} parent=0 // pred_check_branch
    %22 = sbr.rel (0) target = $region13
  $region12: #{auction_net_forward.1} parent=0 // pred_region
    _
  $region13: #{auction_net_forward.1} parent=0 // pred_fallthru
    _
  // Predicated region
  $region14: #{auction_net_forward.1} parent=0 // pred_check
    _
  $region15: #{auction_net_forward.1} parent=0 // pred_check_branch
    %24 = sbr.rel (0) target = $region17
  $region16: #{auction_net_forward.1} parent=0 // pred_region
    _
  $region17: #{auction_net_forward.1} parent=0 // pred_fallthru
    _
  // Predicated region
  $region18: #{auction_net_forward.1} parent=0 // pred_check
    _
  $region19: #{auction_net_forward.1} parent=0 // pred_check_branch
    %26 = sbr.rel (0) target = $region21
  $region20: #{auction_net_forward.1} parent=0 // pred_region
    _
  $region21: #{auction_net_forward.1} parent=0 // pred_fallthru
    _
  // Predicated region
  $region22: #{auction_net_forward.1} parent=0 // pred_check
    _
  $region23: #{auction_net_forward.1} parent=0 // pred_check_branch
    %28 = sbr.rel (0) target = $region25
  $region24: #{auction_net_forward.1} parent=0 // pred_region
    _
  $region25: #{auction_net_forward.1} parent=0 // pred_fallthru
    _
  // Predicated region
  $region26: #{auction_net_forward.1} parent=0 // pred_check
    _
  $region27: #{auction_net_forward.1} parent=0 // pred_check_branch
    %30 = sbr.rel (0) target = $region29
  $region28: #{auction_net_forward.1} parent=0 // pred_region
    _
  $region29: #{auction_net_forward.1} parent=0 // pred_fallthru
    _
  // Predicated region
  $region30: #{auction_net_forward.1} parent=0 // pred_check
    _
  $region31: #{auction_net_forward.1} parent=0 // pred_check_branch
    %32 = sbr.rel (0) target = $region33
  $region32: #{auction_net_forward.1} parent=0 // pred_region
    _
  $region33: #{auction_net_forward.1} parent=0 // pred_fallthru
    _
  // Predicated region
  $region34: #{auction_net_forward.1} parent=0 // pred_check
    _
  $region35: #{auction_net_forward.1} parent=0 // pred_check_branch
    %34 = sbr.rel (0) target = $region37
  $region36: #{auction_net_forward.1} parent=0 // pred_region
    _
  $region37: #{auction_net_forward.1} parent=0 // pred_fallthru
    _
  // Predicated region
  $region38: #{auction_net_forward.1} parent=0 // pred_check
    _
  $region39: #{auction_net_forward.1} parent=0 // pred_check_branch
    %36 = sbr.rel (0) target = $region41
  $region40: #{auction_net_forward.1} parent=0 // pred_region
    _
  $region41: #{auction_net_forward.1} parent=0 // pred_fallthru
    _
  // Predicated region
  $region42: #{auction_net_forward.1} parent=0 // pred_check
    _
  $region43: #{auction_net_forward.1} parent=0 // pred_check_branch
    %38 = sbr.rel (0) target = $region45
  $region44: #{auction_net_forward.1} parent=0 // pred_region
    _
  $region45: #{auction_net_forward.1} parent=0 // pred_fallthru
    _
  %v40 = vld [vmem:[%s0] sm:$0xff]
  %v41 = vld [vmem:[%s0 + $0x8] sm:$0xff]
  %v42 = vpack.c.bf16 %v40, %v40
  %v43 = vpack.c.bf16 %v41, %v41
  %v44 = vld [vmem:[%s1] sm:$0xff]
  %v45 = vld [vmem:[%s1 + $0x8] sm:$0xff]
  %v46 = vld [vmem:[%s1 + $0x10] sm:$0xff]
  %v47 = vld [vmem:[%s1 + $0x18] sm:$0xff]
  %v48 = vld [vmem:[%s1 + $0x20] sm:$0xff]
  %v49 = vld [vmem:[%s1 + $0x28] sm:$0xff]
  %v50 = vld [vmem:[%s1 + $0x30] sm:$0xff]
  %v51 = vld [vmem:[%s1 + $0x38] sm:$0xff]
  %v52 = vld [vmem:[%s1 + $0x40] sm:$0xff]
  %v53 = vld [vmem:[%s1 + $0x48] sm:$0xff]
  %v54 = vld [vmem:[%s1 + $0x50] sm:$0xff]
  %v55 = vld [vmem:[%s1 + $0x58] sm:$0xff]
  %v56 = vld [vmem:[%s1 + $0x60] sm:$0xff]
  %v57 = vld [vmem:[%s1 + $0x68] sm:$0xff]
  %v58 = vld [vmem:[%s1 + $0x70] sm:$0xff]
  %v59 = vld [vmem:[%s1 + $0x78] sm:$0xff]
  %v60 = vld [vmem:[%s1 + $0x80] sm:$0xff]
  %v61 = vld [vmem:[%s1 + $0x88] sm:$0xff]
  %v62 = vld [vmem:[%s1 + $0x90] sm:$0xff]
  %v63 = vld [vmem:[%s1 + $0x98] sm:$0xff]
  %v64 = vld [vmem:[%s1 + $0xa0] sm:$0xff]
  %v65 = vld [vmem:[%s1 + $0xa8] sm:$0xff]
  %v66 = vld [vmem:[%s1 + $0xb0] sm:$0xff]
  %v67 = vld [vmem:[%s1 + $0xb8] sm:$0xff]
  %v68 = vld [vmem:[%s1 + $0xc0] sm:$0xff]
  %v69 = vld [vmem:[%s1 + $0xc8] sm:$0xff]
  %v70 = vld [vmem:[%s1 + $0xd0] sm:$0xff]
  %v71 = vld [vmem:[%s1 + $0xd8] sm:$0xff]
  %v72 = vld [vmem:[%s1 + $0xe0] sm:$0xff]
  %v73 = vld [vmem:[%s1 + $0xe8] sm:$0xff]
  %v74 = vld [vmem:[%s1 + $0xf0] sm:$0xff]
  %v75 = vld [vmem:[%s1 + $0xf8] sm:$0xff]
  %v76 = vld [vmem:[%s1 + $0x100] sm:$0xff]
  %v77 = vld [vmem:[%s1 + $0x108] sm:$0xff]
  %v78 = vld [vmem:[%s1 + $0x110] sm:$0xff]
  %v79 = vld [vmem:[%s1 + $0x118] sm:$0xff]
  %v80 = vld [vmem:[%s1 + $0x120] sm:$0xff]
  %v81 = vld [vmem:[%s1 + $0x128] sm:$0xff]
  %v82 = vld [vmem:[%s1 + $0x130] sm:$0xff]
  %v83 = vld [vmem:[%s1 + $0x138] sm:$0xff]
  %v84 = vld [vmem:[%s1 + $0x140] sm:$0xff]
  %v85 = vld [vmem:[%s1 + $0x148] sm:$0xff]
  %v86 = vld [vmem:[%s1 + $0x150] sm:$0xff]
  %v87 = vld [vmem:[%s1 + $0x158] sm:$0xff]
  %v88 = vld [vmem:[%s1 + $0x160] sm:$0xff]
  %v89 = vld [vmem:[%s1 + $0x168] sm:$0xff]
  %v90 = vld [vmem:[%s1 + $0x170] sm:$0xff]
  %v91 = vld [vmem:[%s1 + $0x178] sm:$0xff]
  %v92 = vld [vmem:[%s1 + $0x180] sm:$0xff]
  %v93 = vld [vmem:[%s1 + $0x188] sm:$0xff]
  %v94 = vld [vmem:[%s1 + $0x190] sm:$0xff]
  %v95 = vld [vmem:[%s1 + $0x198] sm:$0xff]
  %v96 = vld [vmem:[%s1 + $0x1a0] sm:$0xff]
  %v97 = vld [vmem:[%s1 + $0x1a8] sm:$0xff]
  %v98 = vld [vmem:[%s1 + $0x1b0] sm:$0xff]
  %v99 = vld [vmem:[%s1 + $0x1b8] sm:$0xff]
  %v100 = vld [vmem:[%s1 + $0x1c0] sm:$0xff]
  %v101 = vld [vmem:[%s1 + $0x1c8] sm:$0xff]
  %v102 = vld [vmem:[%s1 + $0x1d0] sm:$0xff]
  %v103 = vld [vmem:[%s1 + $0x1d8] sm:$0xff]
  %v104 = vld [vmem:[%s1 + $0x1e0] sm:$0xff]
  %v105 = vld [vmem:[%s1 + $0x1e8] sm:$0xff]
  %v106 = vld [vmem:[%s1 + $0x1f0] sm:$0xff]
  %v107 = vld [vmem:[%s1 + $0x1f8] sm:$0xff]
  %v108 = vld [vmem:[%s1 + $0x200] sm:$0xff]
  %v109 = vld [vmem:[%s1 + $0x208] sm:$0xff]
  %v110 = vld [vmem:[%s1 + $0x210] sm:$0xff]
  %v111 = vld [vmem:[%s1 + $0x218] sm:$0xff]
  %v112 = vld [vmem:[%s1 + $0x220] sm:$0xff]
  %v113 = vld [vmem:[%s1 + $0x228] sm:$0xff]
  %v114 = vld [vmem:[%s1 + $0x230] sm:$0xff]
  %v115 = vld [vmem:[%s1 + $0x238] sm:$0xff]
  %v116 = vld [vmem:[%s2] sm:$0xff]
  %v118 = vlaneseq
  %v119 = vshrl.u32 %v118, 7
  %v120 = vsub.s32 0, %v119
  %v121 = vrot.slane %v116, %v120
  %v122 = vlaneseq
  %v123 = vshrl.u32 %v122, 7
  %v124 = vsub.s32 1, %v123
  %v125 = vrot.slane %v116, %v124
  %v126 = vlaneseq
  %v127 = vshrl.u32 %v126, 7
  %v128 = vsub.s32 2, %v127
  %v129 = vrot.slane %v116, %v128
  %v130 = vlaneseq
  %v131 = vshrl.u32 %v130, 7
  %v132 = vsub.s32 3, %v131
  %v133 = vrot.slane %v116, %v132
  %v134 = vlaneseq
  %v135 = vshrl.u32 %v134, 7
  %v136 = vsub.s32 4, %v135
  %v137 = vrot.slane %v116, %v136
  %v138 = vlaneseq
  %v139 = vshrl.u32 %v138, 7
  %v140 = vsub.s32 5, %v139
  %v141 = vrot.slane %v116, %v140
  %v142 = vlaneseq
  %v143 = vshrl.u32 %v142, 7
  %v144 = vsub.s32 6, %v143
  %v145 = vrot.slane %v116, %v144
  %v146 = vlaneseq
  %v147 = vshrl.u32 %v146, 7
  %v148 = vsub.s32 7, %v147
  %v149 = vrot.slane %v116, %v148
  %v230 = vunpack.c.l.b16 %v44
  %v231 = vunpack.c.h.b16 %v44
  %v232 = vunpack.c.l.b16 %v45
  %v233 = vunpack.c.h.b16 %v45
  %v234 = vunpack.c.l.b16 %v46
  %v235 = vunpack.c.h.b16 %v46
  %v236 = vunpack.c.l.b16 %v47
  %v237 = vunpack.c.h.b16 %v47
  %v238 = vunpack.c.l.b16 %v48
  %v239 = vunpack.c.h.b16 %v48
  %v240 = vunpack.c.l.b16 %v49
  %v241 = vunpack.c.h.b16 %v49
  %v242 = vunpack.c.l.b16 %v50
  %v243 = vunpack.c.h.b16 %v50
  %v244 = vunpack.c.l.b16 %v51
  %v245 = vunpack.c.h.b16 %v51
  %v246 = vunpack.c.l.b16 %v52
  %v247 = vunpack.c.h.b16 %v52
  %v248 = vunpack.c.l.b16 %v53
  %v249 = vunpack.c.h.b16 %v53
  %v250 = vunpack.c.l.b16 %v54
  %v251 = vunpack.c.h.b16 %v54
  %v252 = vunpack.c.l.b16 %v55
  %v253 = vunpack.c.h.b16 %v55
  %v254 = vunpack.c.l.b16 %v56
  %v255 = vunpack.c.h.b16 %v56
  %v256 = vunpack.c.l.b16 %v57
  %v257 = vunpack.c.h.b16 %v57
  %v258 = vunpack.c.l.b16 %v58
  %v259 = vunpack.c.h.b16 %v58
  %v260 = vunpack.c.l.b16 %v59
  %v261 = vunpack.c.h.b16 %v59
  %v262 = vunpack.c.l.b16 %v60
  %v263 = vunpack.c.h.b16 %v60
  %v264 = vunpack.c.l.b16 %v61
  %v265 = vunpack.c.h.b16 %v61
  %v266 = vunpack.c.l.b16 %v62
  %v267 = vunpack.c.h.b16 %v62
  %v268 = vunpack.c.l.b16 %v63
  %v269 = vunpack.c.h.b16 %v63
  %v270 = vunpack.c.l.b16 %v64
  %v271 = vunpack.c.h.b16 %v64
  %v272 = vunpack.c.l.b16 %v65
  %v273 = vunpack.c.h.b16 %v65
  %v274 = vunpack.c.l.b16 %v66
  %v275 = vunpack.c.h.b16 %v66
  %v276 = vunpack.c.l.b16 %v67
  %v277 = vunpack.c.h.b16 %v67
  %v278 = vunpack.c.l.b16 %v68
  %v279 = vunpack.c.h.b16 %v68
  %v280 = vunpack.c.l.b16 %v69
  %v281 = vunpack.c.h.b16 %v69
  %v282 = vunpack.c.l.b16 %v70
  %v283 = vunpack.c.h.b16 %v70
  %v284 = vunpack.c.l.b16 %v71
  %v285 = vunpack.c.h.b16 %v71
  %v286 = vunpack.c.l.b16 %v72
  %v287 = vunpack.c.h.b16 %v72
  %v288 = vunpack.c.l.b16 %v73
  %v289 = vunpack.c.h.b16 %v73
  %v290 = vunpack.c.l.b16 %v74
  %v291 = vunpack.c.h.b16 %v74
  %v292 = vunpack.c.l.b16 %v75
  %v293 = vunpack.c.h.b16 %v75
  %v294 = vunpack.c.l.b16 %v76
  %v295 = vunpack.c.h.b16 %v76
  %v296 = vunpack.c.l.b16 %v77
  %v297 = vunpack.c.h.b16 %v77
  %v298 = vunpack.c.l.b16 %v78
  %v299 = vunpack.c.h.b16 %v78
  %v300 = vunpack.c.l.b16 %v79
  %v301 = vunpack.c.h.b16 %v79
  %v302 = vunpack.c.l.b16 %v80
  %v303 = vunpack.c.h.b16 %v80
  %v304 = vunpack.c.l.b16 %v81
  %v305 = vunpack.c.h.b16 %v81
  %v306 = vunpack.c.l.b16 %v82
  %v307 = vunpack.c.h.b16 %v82
  %v308 = vunpack.c.l.b16 %v83
  %v309 = vunpack.c.h.b16 %v83
  %v310 = vunpack.c.l.b16 %v84
  %v311 = vunpack.c.h.b16 %v84
  %v312 = vunpack.c.l.b16 %v85
  %v313 = vunpack.c.h.b16 %v85
  %v314 = vunpack.c.l.b16 %v86
  %v315 = vunpack.c.h.b16 %v86
  %v316 = vunpack.c.l.b16 %v87
  %v317 = vunpack.c.h.b16 %v87
  %v318 = vunpack.c.l.b16 %v88
  %v319 = vunpack.c.h.b16 %v88
  %v320 = vunpack.c.l.b16 %v89
  %v321 = vunpack.c.h.b16 %v89
  %v322 = vunpack.c.l.b16 %v90
  %v323 = vunpack.c.h.b16 %v90
  %v324 = vunpack.c.l.b16 %v91
  %v325 = vunpack.c.h.b16 %v91
  %v326 = vunpack.c.l.b16 %v92
  %v327 = vunpack.c.h.b16 %v92
  %v328 = vunpack.c.l.b16 %v93
  %v329 = vunpack.c.h.b16 %v93
  %v330 = vunpack.c.l.b16 %v94
  %v331 = vunpack.c.h.b16 %v94
  %v332 = vunpack.c.l.b16 %v95
  %v333 = vunpack.c.h.b16 %v95
  %v334 = vunpack.c.l.b16 %v96
  %v335 = vunpack.c.h.b16 %v96
  %v336 = vunpack.c.l.b16 %v97
  %v337 = vunpack.c.h.b16 %v97
  %v338 = vunpack.c.l.b16 %v98
  %v339 = vunpack.c.h.b16 %v98
  %v340 = vunpack.c.l.b16 %v99
  %v341 = vunpack.c.h.b16 %v99
  %v342 = vunpack.c.l.b16 %v100
  %v343 = vunpack.c.h.b16 %v100
  %v344 = vunpack.c.l.b16 %v101
  %v345 = vunpack.c.h.b16 %v101
  %v346 = vunpack.c.l.b16 %v102
  %v347 = vunpack.c.h.b16 %v102
  %v348 = vunpack.c.l.b16 %v103
  %v349 = vunpack.c.h.b16 %v103
  %v350 = vunpack.c.l.b16 %v104
  %v351 = vunpack.c.h.b16 %v104
  %v352 = vunpack.c.l.b16 %v105
  %v353 = vunpack.c.h.b16 %v105
  %v354 = vunpack.c.l.b16 %v106
  %v355 = vunpack.c.h.b16 %v106
  %v356 = vunpack.c.l.b16 %v107
  %v357 = vunpack.c.h.b16 %v107
  %v358 = vunpack.c.l.b16 %v108
  %v359 = vunpack.c.h.b16 %v108
  %v360 = vunpack.c.l.b16 %v109
  %v361 = vunpack.c.h.b16 %v109
  %v362 = vunpack.c.l.b16 %v110
  %v363 = vunpack.c.h.b16 %v110
  %v364 = vunpack.c.l.b16 %v111
  %v365 = vunpack.c.h.b16 %v111
  %v366 = vunpack.c.l.b16 %v112
  %v367 = vunpack.c.h.b16 %v112
  %v368 = vunpack.c.l.b16 %v113
  %v369 = vunpack.c.h.b16 %v113
  %v370 = vunpack.c.l.b16 %v114
  %v371 = vunpack.c.h.b16 %v114
  %v372 = vunpack.c.l.b16 %v115
  %v373 = vunpack.c.h.b16 %v115
  %v374 = vpack.c.b16 %v238, %v230
  %v375 = vpack.c.b16 %v239, %v231
  %v376 = vpack.c.b16 %v240, %v232
  %v377 = vpack.c.b16 %v241, %v233
  %v378 = vpack.c.b16 %v242, %v234
  %v379 = vpack.c.b16 %v243, %v235
  %v380 = vpack.c.b16 %v244, %v236
  %v381 = vpack.c.b16 %v245, %v237
  %v382 = vpack.c.b16 %v254, %v246
  %v383 = vpack.c.b16 %v255, %v247
  %v384 = vpack.c.b16 %v256, %v248
  %v385 = vpack.c.b16 %v257, %v249
  %v386 = vpack.c.b16 %v258, %v250
  %v387 = vpack.c.b16 %v259, %v251
  %v388 = vpack.c.b16 %v260, %v252
  %v389 = vpack.c.b16 %v261, %v253
  %v390 = vpack.c.b16 %v270, %v262
  %v391 = vpack.c.b16 %v271, %v263
  %v392 = vpack.c.b16 %v272, %v264
  %v393 = vpack.c.b16 %v273, %v265
  %v394 = vpack.c.b16 %v274, %v266
  %v395 = vpack.c.b16 %v275, %v267
  %v396 = vpack.c.b16 %v276, %v268
  %v397 = vpack.c.b16 %v277, %v269
  %v398 = vpack.c.b16 %v286, %v278
  %v399 = vpack.c.b16 %v287, %v279
  %v400 = vpack.c.b16 %v288, %v280
  %v401 = vpack.c.b16 %v289, %v281
  %v402 = vpack.c.b16 %v290, %v282
  %v403 = vpack.c.b16 %v291, %v283
  %v404 = vpack.c.b16 %v292, %v284
  %v405 = vpack.c.b16 %v293, %v285
  %v406 = vpack.c.b16 %v302, %v294
  %v407 = vpack.c.b16 %v303, %v295
  %v408 = vpack.c.b16 %v304, %v296
  %v409 = vpack.c.b16 %v305, %v297
  %v410 = vpack.c.b16 %v306, %v298
  %v411 = vpack.c.b16 %v307, %v299
  %v412 = vpack.c.b16 %v308, %v300
  %v413 = vpack.c.b16 %v309, %v301
  %v414 = vpack.c.b16 %v318, %v310
  %v415 = vpack.c.b16 %v319, %v311
  %v416 = vpack.c.b16 %v320, %v312
  %v417 = vpack.c.b16 %v321, %v313
  %v418 = vpack.c.b16 %v322, %v314
  %v419 = vpack.c.b16 %v323, %v315
  %v420 = vpack.c.b16 %v324, %v316
  %v421 = vpack.c.b16 %v325, %v317
  %v422 = vpack.c.b16 %v334, %v326
  %v423 = vpack.c.b16 %v335, %v327
  %v424 = vpack.c.b16 %v336, %v328
  %v425 = vpack.c.b16 %v337, %v329
  %v426 = vpack.c.b16 %v338, %v330
  %v427 = vpack.c.b16 %v339, %v331
  %v428 = vpack.c.b16 %v340, %v332
  %v429 = vpack.c.b16 %v341, %v333
  %v430 = vpack.c.b16 %v350, %v342
  %v431 = vpack.c.b16 %v351, %v343
  %v432 = vpack.c.b16 %v352, %v344
  %v433 = vpack.c.b16 %v353, %v345
  %v434 = vpack.c.b16 %v354, %v346
  %v435 = vpack.c.b16 %v355, %v347
  %v436 = vpack.c.b16 %v356, %v348
  %v437 = vpack.c.b16 %v357, %v349
  %v438 = vpack.c.b16 %v366, %v358
  %v439 = vpack.c.b16 %v367, %v359
  %v440 = vpack.c.b16 %v368, %v360
  %v441 = vpack.c.b16 %v369, %v361
  %v442 = vpack.c.b16 %v370, %v362
  %v443 = vpack.c.b16 %v371, %v363
  %v444 = vpack.c.b16 %v372, %v364
  %v445 = vpack.c.b16 %v373, %v365
  %vm518 = vcmask 130048
  %v520 = vsel %vm518, %v43, 0
  %522 = vmatprep.subr.bf16.mxu0 %v375
  %523 = vmatpush1.bf16.msra.mxu0 %v374
  %524 = vmatprep.subr.bf16.mxu0 %v383
  %525 = vmatpush1.bf16.msra.mxu0 %v382
  %526 = vmatprep.subr.bf16.mxu0 %v391
  %527 = vmatpush1.bf16.msra.mxu0 %v390
  %528 = vmatprep.subr.bf16.mxu0 %v399
  %529 = vmatpush1.bf16.msra.mxu0 %v398
  %530 = vmatprep.subr.bf16.mxu0 %v407
  %531 = vmatpush1.bf16.msra.mxu0 %v406
  %532 = vmatprep.subr.bf16.mxu0 %v415
  %533 = vmatpush1.bf16.msra.mxu0 %v414
  %534 = vmatprep.subr.bf16.mxu0 %v423
  %535 = vmatpush1.bf16.msra.mxu0 %v422
  %536 = vmatprep.subr.bf16.mxu0 %v431
  %537 = vmatpush1.bf16.msra.mxu0 %v430
  %538 = vmatprep.subr.bf16.mxu0 %v439
  %539 = vmatpush1.bf16.msra.mxu0 %v438
  %540 = vmatprep.subr.bf16.mxu0 0
  %541 = vmatpush1.bf16.msra.mxu0 0
  %542 = vmatprep.subr.bf16.mxu0 0
  %543 = vmatpush1.bf16.msra.mxu0 0
  %544 = vmatprep.subr.bf16.mxu0 0
  %545 = vmatpush1.bf16.msra.mxu0 0
  %546 = vmatprep.subr.bf16.mxu0 0
  %547 = vmatpush1.bf16.msra.mxu0 0
  %548 = vmatprep.subr.bf16.mxu0 0
  %549 = vmatpush1.bf16.msra.mxu0 0
  %550 = vmatprep.subr.bf16.mxu0 0
  %551 = vmatpush1.bf16.msra.mxu0 0
  %552 = vmatprep.subr.bf16.mxu0 0
  %553 = vmatpush1.bf16.msra.mxu0 0
  %554 = vmatprep.mubr.bf16.mxu0 %v520
  %555 = vmatmul.mubr.bf16.gmra.mrb[0].mxu0 %v42
  %v556 = vpop.f32.mrb[0].mxu0
  %v557 = vadd.f32 %v121, %v556
  %v558 = vpop.f32.mrb[0].mxu0
  %v559 = vadd.f32 %v125, %v558
  %v560 = vpop.f32.mrb[0].mxu0
  %v561 = vpop.f32.mrb[0].mxu0
  %562 = vdwg.mxu0
  %563 = vmatprep.subr.bf16.mxu0 %v377
  %564 = vmatpush1.bf16.msra.mxu0 %v376
  %565 = vmatprep.subr.bf16.mxu0 %v385
  %566 = vmatpush1.bf16.msra.mxu0 %v384
  %567 = vmatprep.subr.bf16.mxu0 %v393
  %568 = vmatpush1.bf16.msra.mxu0 %v392
  %569 = vmatprep.subr.bf16.mxu0 %v401
  %570 = vmatpush1.bf16.msra.mxu0 %v400
  %571 = vmatprep.subr.bf16.mxu0 %v409
  %572 = vmatpush1.bf16.msra.mxu0 %v408
  %573 = vmatprep.subr.bf16.mxu0 %v417
  %574 = vmatpush1.bf16.msra.mxu0 %v416
  %575 = vmatprep.subr.bf16.mxu0 %v425
  %576 = vmatpush1.bf16.msra.mxu0 %v424
  %577 = vmatprep.subr.bf16.mxu0 %v433
  %578 = vmatpush1.bf16.msra.mxu0 %v432
  %579 = vmatprep.subr.bf16.mxu0 %v441
  %580 = vmatpush1.bf16.msra.mxu0 %v440
  %581 = vmatprep.subr.bf16.mxu0 0
  %582 = vmatpush1.bf16.msra.mxu0 0
  %583 = vmatprep.subr.bf16.mxu0 0
  %584 = vmatpush1.bf16.msra.mxu0 0
  %585 = vmatprep.subr.bf16.mxu0 0
  %586 = vmatpush1.bf16.msra.mxu0 0
  %587 = vmatprep.subr.bf16.mxu0 0
  %588 = vmatpush1.bf16.msra.mxu0 0
  %589 = vmatprep.subr.bf16.mxu0 0
  %590 = vmatpush1.bf16.msra.mxu0 0
  %591 = vmatprep.subr.bf16.mxu0 0
  %592 = vmatpush1.bf16.msra.mxu0 0
  %593 = vmatprep.subr.bf16.mxu0 0
  %594 = vmatpush1.bf16.msra.mxu0 0
  %595 = vmatprep.mubr.bf16.mxu0 %v520
  %596 = vmatmul.mubr.bf16.gmra.mrb[0].mxu0 %v42
  %v597 = vpop.f32.mrb[0].mxu0
  %v598 = vadd.f32 %v129, %v597
  %v599 = vpop.f32.mrb[0].mxu0
  %v600 = vadd.f32 %v133, %v599
  %v601 = vpop.f32.mrb[0].mxu0
  %v602 = vpop.f32.mrb[0].mxu0
  %603 = vdwg.mxu0
  %604 = vmatprep.subr.bf16.mxu0 %v379
  %605 = vmatpush1.bf16.msra.mxu0 %v378
  %606 = vmatprep.subr.bf16.mxu0 %v387
  %607 = vmatpush1.bf16.msra.mxu0 %v386
  %608 = vmatprep.subr.bf16.mxu0 %v395
  %609 = vmatpush1.bf16.msra.mxu0 %v394
  %610 = vmatprep.subr.bf16.mxu0 %v403
  %611 = vmatpush1.bf16.msra.mxu0 %v402
  %612 = vmatprep.subr.bf16.mxu0 %v411
  %613 = vmatpush1.bf16.msra.mxu0 %v410
  %614 = vmatprep.subr.bf16.mxu0 %v419
  %615 = vmatpush1.bf16.msra.mxu0 %v418
  %616 = vmatprep.subr.bf16.mxu0 %v427
  %617 = vmatpush1.bf16.msra.mxu0 %v426
  %618 = vmatprep.subr.bf16.mxu0 %v435
  %619 = vmatpush1.bf16.msra.mxu0 %v434
  %620 = vmatprep.subr.bf16.mxu0 %v443
  %621 = vmatpush1.bf16.msra.mxu0 %v442
  %622 = vmatprep.subr.bf16.mxu0 0
  %623 = vmatpush1.bf16.msra.mxu0 0
  %624 = vmatprep.subr.bf16.mxu0 0
  %625 = vmatpush1.bf16.msra.mxu0 0
  %626 = vmatprep.subr.bf16.mxu0 0
  %627 = vmatpush1.bf16.msra.mxu0 0
  %628 = vmatprep.subr.bf16.mxu0 0
  %629 = vmatpush1.bf16.msra.mxu0 0
  %630 = vmatprep.subr.bf16.mxu0 0
  %631 = vmatpush1.bf16.msra.mxu0 0
  %632 = vmatprep.subr.bf16.mxu0 0
  %633 = vmatpush1.bf16.msra.mxu0 0
  %634 = vmatprep.subr.bf16.mxu0 0
  %635 = vmatpush1.bf16.msra.mxu0 0
  %636 = vmatprep.mubr.bf16.mxu0 %v520
  %637 = vmatmul.mubr.bf16.gmra.mrb[0].mxu0 %v42
  %v638 = vpop.f32.mrb[0].mxu0
  %v639 = vadd.f32 %v137, %v638
  %v640 = vpop.f32.mrb[0].mxu0
  %v641 = vadd.f32 %v141, %v640
  %v642 = vpop.f32.mrb[0].mxu0
  %v643 = vpop.f32.mrb[0].mxu0
  %644 = vdwg.mxu0
  %645 = vmatprep.subr.bf16.mxu0 %v381
  %646 = vmatpush1.bf16.msra.mxu0 %v380
  %647 = vmatprep.subr.bf16.mxu0 %v389
  %648 = vmatpush1.bf16.msra.mxu0 %v388
  %649 = vmatprep.subr.bf16.mxu0 %v397
  %650 = vmatpush1.bf16.msra.mxu0 %v396
  %651 = vmatprep.subr.bf16.mxu0 %v405
  %652 = vmatpush1.bf16.msra.mxu0 %v404
  %653 = vmatprep.subr.bf16.mxu0 %v413
  %654 = vmatpush1.bf16.msra.mxu0 %v412
  %655 = vmatprep.subr.bf16.mxu0 %v421
  %656 = vmatpush1.bf16.msra.mxu0 %v420
  %657 = vmatprep.subr.bf16.mxu0 %v429
  %658 = vmatpush1.bf16.msra.mxu0 %v428
  %659 = vmatprep.subr.bf16.mxu0 %v437
  %660 = vmatpush1.bf16.msra.mxu0 %v436
  %661 = vmatprep.subr.bf16.mxu0 %v445
  %662 = vmatpush1.bf16.msra.mxu0 %v444
  %663 = vmatprep.subr.bf16.mxu0 0
  %664 = vmatpush1.bf16.msra.mxu0 0
  %665 = vmatprep.subr.bf16.mxu0 0
  %666 = vmatpush1.bf16.msra.mxu0 0
  %667 = vmatprep.subr.bf16.mxu0 0
  %668 = vmatpush1.bf16.msra.mxu0 0
  %669 = vmatprep.subr.bf16.mxu0 0
  %670 = vmatpush1.bf16.msra.mxu0 0
  %671 = vmatprep.subr.bf16.mxu0 0
  %672 = vmatpush1.bf16.msra.mxu0 0
  %673 = vmatprep.subr.bf16.mxu0 0
  %674 = vmatpush1.bf16.msra.mxu0 0
  %675 = vmatprep.subr.bf16.mxu0 0
  %676 = vmatpush1.bf16.msra.mxu0 0
  %677 = vmatprep.mubr.bf16.mxu0 %v520
  %678 = vmatmul.mubr.bf16.gmra.mrb[0].mxu0 %v42
  %v679 = vpop.f32.mrb[0].mxu0
  %v680 = vadd.f32 %v145, %v679
  %v681 = vpop.f32.mrb[0].mxu0
  %v682 = vadd.f32 %v149, %v681
  %v683 = vpop.f32.mrb[0].mxu0
  %v684 = vpop.f32.mrb[0].mxu0
  %685 = vdwg.mxu0
  %v686 = vmax.f32 %v557, 0.0
  %v687 = vmax.f32 %v559, 0.0
  %v688 = vmax.f32 %v598, 0.0
  %v689 = vmax.f32 %v600, 0.0
  %v690 = vmax.f32 %v639, 0.0
  %v691 = vmax.f32 %v641, 0.0
  %v692 = vmax.f32 %v680, 0.0
  %v693 = vmax.f32 %v682, 0.0
  %v694 = vpack.c.bf16 %v686, %v686
  %v695 = vpack.c.bf16 %v687, %v687
  %v696 = vpack.c.bf16 %v688, %v688
  %v697 = vpack.c.bf16 %v689, %v689
  %v698 = vpack.c.bf16 %v690, %v690
  %v699 = vpack.c.bf16 %v691, %v691
  %v700 = vpack.c.bf16 %v692, %v692
  %v701 = vpack.c.bf16 %v693, %v693
  %v702 = vld [vmem:[%s3] sm:$0xff]
  %v703 = vld [vmem:[%s3 + $0x8] sm:$0xff]
  %v704 = vld [vmem:[%s3 + $0x10] sm:$0xff]
  %v705 = vld [vmem:[%s3 + $0x18] sm:$0xff]
  %v706 = vld [vmem:[%s3 + $0x20] sm:$0xff]
  %v707 = vld [vmem:[%s3 + $0x28] sm:$0xff]
  %v708 = vld [vmem:[%s3 + $0x30] sm:$0xff]
  %v709 = vld [vmem:[%s3 + $0x38] sm:$0xff]
  %v710 = vld [vmem:[%s3 + $0x40] sm:$0xff]
  %v711 = vld [vmem:[%s3 + $0x48] sm:$0xff]
  %v712 = vld [vmem:[%s3 + $0x50] sm:$0xff]
  %v713 = vld [vmem:[%s3 + $0x58] sm:$0xff]
  %v714 = vld [vmem:[%s3 + $0x60] sm:$0xff]
  %v715 = vld [vmem:[%s3 + $0x68] sm:$0xff]
  %v716 = vld [vmem:[%s3 + $0x70] sm:$0xff]
  %v717 = vld [vmem:[%s3 + $0x78] sm:$0xff]
  %v718 = vld [vmem:[%s3 + $0x80] sm:$0xff]
  %v719 = vld [vmem:[%s3 + $0x88] sm:$0xff]
  %v720 = vld [vmem:[%s3 + $0x90] sm:$0xff]
  %v721 = vld [vmem:[%s3 + $0x98] sm:$0xff]
  %v722 = vld [vmem:[%s3 + $0xa0] sm:$0xff]
  %v723 = vld [vmem:[%s3 + $0xa8] sm:$0xff]
  %v724 = vld [vmem:[%s3 + $0xb0] sm:$0xff]
  %v725 = vld [vmem:[%s3 + $0xb8] sm:$0xff]
  %v726 = vld [vmem:[%s3 + $0xc0] sm:$0xff]
  %v727 = vld [vmem:[%s3 + $0xc8] sm:$0xff]
  %v728 = vld [vmem:[%s3 + $0xd0] sm:$0xff]
  %v729 = vld [vmem:[%s3 + $0xd8] sm:$0xff]
  %v730 = vld [vmem:[%s3 + $0xe0] sm:$0xff]
  %v731 = vld [vmem:[%s3 + $0xe8] sm:$0xff]
  %v732 = vld [vmem:[%s3 + $0xf0] sm:$0xff]
  %v733 = vld [vmem:[%s3 + $0xf8] sm:$0xff]
  %v734 = vld [vmem:[%s3 + $0x100] sm:$0xff]
  %v735 = vld [vmem:[%s3 + $0x108] sm:$0xff]
  %v736 = vld [vmem:[%s3 + $0x110] sm:$0xff]
  %v737 = vld [vmem:[%s3 + $0x118] sm:$0xff]
  %v738 = vld [vmem:[%s3 + $0x120] sm:$0xff]
  %v739 = vld [vmem:[%s3 + $0x128] sm:$0xff]
  %v740 = vld [vmem:[%s3 + $0x130] sm:$0xff]
  %v741 = vld [vmem:[%s3 + $0x138] sm:$0xff]
  %v742 = vld [vmem:[%s3 + $0x140] sm:$0xff]
  %v743 = vld [vmem:[%s3 + $0x148] sm:$0xff]
  %v744 = vld [vmem:[%s3 + $0x150] sm:$0xff]
  %v745 = vld [vmem:[%s3 + $0x158] sm:$0xff]
  %v746 = vld [vmem:[%s3 + $0x160] sm:$0xff]
  %v747 = vld [vmem:[%s3 + $0x168] sm:$0xff]
  %v748 = vld [vmem:[%s3 + $0x170] sm:$0xff]
  %v749 = vld [vmem:[%s3 + $0x178] sm:$0xff]
  %v750 = vld [vmem:[%s3 + $0x180] sm:$0xff]
  %v751 = vld [vmem:[%s3 + $0x188] sm:$0xff]
  %v752 = vld [vmem:[%s3 + $0x190] sm:$0xff]
  %v753 = vld [vmem:[%s3 + $0x198] sm:$0xff]
  %v754 = vld [vmem:[%s3 + $0x1a0] sm:$0xff]
  %v755 = vld [vmem:[%s3 + $0x1a8] sm:$0xff]
  %v756 = vld [vmem:[%s3 + $0x1b0] sm:$0xff]
  %v757 = vld [vmem:[%s3 + $0x1b8] sm:$0xff]
  %v758 = vld [vmem:[%s3 + $0x1c0] sm:$0xff]
  %v759 = vld [vmem:[%s3 + $0x1c8] sm:$0xff]
  %v760 = vld [vmem:[%s3 + $0x1d0] sm:$0xff]
  %v761 = vld [vmem:[%s3 + $0x1d8] sm:$0xff]
  %v762 = vld [vmem:[%s3 + $0x1e0] sm:$0xff]
  %v763 = vld [vmem:[%s3 + $0x1e8] sm:$0xff]
  %v764 = vld [vmem:[%s3 + $0x1f0] sm:$0xff]
  %v765 = vld [vmem:[%s3 + $0x1f8] sm:$0xff]
  %v766 = vld [vmem:[%s3 + $0x200] sm:$0xff]
  %v767 = vld [vmem:[%s3 + $0x208] sm:$0xff]
  %v768 = vld [vmem:[%s3 + $0x210] sm:$0xff]
  %v769 = vld [vmem:[%s3 + $0x218] sm:$0xff]
  %v770 = vld [vmem:[%s3 + $0x220] sm:$0xff]
  %v771 = vld [vmem:[%s3 + $0x228] sm:$0xff]
  %v772 = vld [vmem:[%s3 + $0x230] sm:$0xff]
  %v773 = vld [vmem:[%s3 + $0x238] sm:$0xff]
  %v774 = vld [vmem:[%s3 + $0x240] sm:$0xff]
  %v775 = vld [vmem:[%s3 + $0x248] sm:$0xff]
  %v776 = vld [vmem:[%s3 + $0x250] sm:$0xff]
  %v777 = vld [vmem:[%s3 + $0x258] sm:$0xff]
  %v778 = vld [vmem:[%s3 + $0x260] sm:$0xff]
  %v779 = vld [vmem:[%s3 + $0x268] sm:$0xff]
  %v780 = vld [vmem:[%s3 + $0x270] sm:$0xff]
  %v781 = vld [vmem:[%s3 + $0x278] sm:$0xff]
  %v782 = vld [vmem:[%s3 + $0x280] sm:$0xff]
  %v783 = vld [vmem:[%s3 + $0x288] sm:$0xff]
  %v784 = vld [vmem:[%s3 + $0x290] sm:$0xff]
  %v785 = vld [vmem:[%s3 + $0x298] sm:$0xff]
  %v786 = vld [vmem:[%s3 + $0x2a0] sm:$0xff]
  %v787 = vld [vmem:[%s3 + $0x2a8] sm:$0xff]
  %v788 = vld [vmem:[%s3 + $0x2b0] sm:$0xff]
  %v789 = vld [vmem:[%s3 + $0x2b8] sm:$0xff]
  %v790 = vld [vmem:[%s3 + $0x2c0] sm:$0xff]
  %v791 = vld [vmem:[%s3 + $0x2c8] sm:$0xff]
  %v792 = vld [vmem:[%s3 + $0x2d0] sm:$0xff]
  %v793 = vld [vmem:[%s3 + $0x2d8] sm:$0xff]
  %v794 = vld [vmem:[%s3 + $0x2e0] sm:$0xff]
  %v795 = vld [vmem:[%s3 + $0x2e8] sm:$0xff]
  %v796 = vld [vmem:[%s3 + $0x2f0] sm:$0xff]
  %v797 = vld [vmem:[%s3 + $0x2f8] sm:$0xff]
  %v798 = vld [vmem:[%s3 + $0x300] sm:$0xff]
  %v799 = vld [vmem:[%s3 + $0x308] sm:$0xff]
  %v800 = vld [vmem:[%s3 + $0x310] sm:$0xff]
  %v801 = vld [vmem:[%s3 + $0x318] sm:$0xff]
  %v802 = vld [vmem:[%s3 + $0x320] sm:$0xff]
  %v803 = vld [vmem:[%s3 + $0x328] sm:$0xff]
  %v804 = vld [vmem:[%s3 + $0x330] sm:$0xff]
  %v805 = vld [vmem:[%s3 + $0x338] sm:$0xff]
  %v806 = vld [vmem:[%s3 + $0x340] sm:$0xff]
  %v807 = vld [vmem:[%s3 + $0x348] sm:$0xff]
  %v808 = vld [vmem:[%s3 + $0x350] sm:$0xff]
  %v809 = vld [vmem:[%s3 + $0x358] sm:$0xff]
  %v810 = vld [vmem:[%s3 + $0x360] sm:$0xff]
  %v811 = vld [vmem:[%s3 + $0x368] sm:$0xff]
  %v812 = vld [vmem:[%s3 + $0x370] sm:$0xff]
  %v813 = vld [vmem:[%s3 + $0x378] sm:$0xff]
  %v814 = vld [vmem:[%s3 + $0x380] sm:$0xff]
  %v815 = vld [vmem:[%s3 + $0x388] sm:$0xff]
  %v816 = vld [vmem:[%s3 + $0x390] sm:$0xff]
  %v817 = vld [vmem:[%s3 + $0x398] sm:$0xff]
  %v818 = vld [vmem:[%s3 + $0x3a0] sm:$0xff]
  %v819 = vld [vmem:[%s3 + $0x3a8] sm:$0xff]
  %v820 = vld [vmem:[%s3 + $0x3b0] sm:$0xff]
  %v821 = vld [vmem:[%s3 + $0x3b8] sm:$0xff]
  %v822 = vld [vmem:[%s3 + $0x3c0] sm:$0xff]
  %v823 = vld [vmem:[%s3 + $0x3c8] sm:$0xff]
  %v824 = vld [vmem:[%s3 + $0x3d0] sm:$0xff]
  %v825 = vld [vmem:[%s3 + $0x3d8] sm:$0xff]
  %v826 = vld [vmem:[%s3 + $0x3e0] sm:$0xff]
  %v827 = vld [vmem:[%s3 + $0x3e8] sm:$0xff]
  %v828 = vld [vmem:[%s3 + $0x3f0] sm:$0xff]
  %v829 = vld [vmem:[%s3 + $0x3f8] sm:$0xff]
  %v830 = vld [vmem:[%s4] sm:$0x3]
  %v832 = vlaneseq
  %v833 = vshrl.u32 %v832, 7
  %v834 = vsub.s32 0, %v833
  %v835 = vrot.slane %v830, %v834
  %v836 = vlaneseq
  %v837 = vshrl.u32 %v836, 7
  %v838 = vsub.s32 1, %v837
  %v839 = vrot.slane %v830, %v838
  %v970 = vunpack.c.l.b16 %v702
  %v971 = vunpack.c.h.b16 %v702
  %v972 = vunpack.c.l.b16 %v703
  %v973 = vunpack.c.h.b16 %v703
  %v974 = vunpack.c.l.b16 %v704
  %v975 = vunpack.c.h.b16 %v704
  %v976 = vunpack.c.l.b16 %v705
  %v977 = vunpack.c.h.b16 %v705
  %v978 = vunpack.c.l.b16 %v706
  %v979 = vunpack.c.h.b16 %v706
  %v980 = vunpack.c.l.b16 %v707
  %v981 = vunpack.c.h.b16 %v707
  %v982 = vunpack.c.l.b16 %v708
  %v983 = vunpack.c.h.b16 %v708
  %v984 = vunpack.c.l.b16 %v709
  %v985 = vunpack.c.h.b16 %v709
  %v986 = vunpack.c.l.b16 %v710
  %v987 = vunpack.c.h.b16 %v710
  %v988 = vunpack.c.l.b16 %v711
  %v989 = vunpack.c.h.b16 %v711
  %v990 = vunpack.c.l.b16 %v712
  %v991 = vunpack.c.h.b16 %v712
  %v992 = vunpack.c.l.b16 %v713
  %v993 = vunpack.c.h.b16 %v713
  %v994 = vunpack.c.l.b16 %v714
  %v995 = vunpack.c.h.b16 %v714
  %v996 = vunpack.c.l.b16 %v715
  %v997 = vunpack.c.h.b16 %v715
  %v998 = vunpack.c.l.b16 %v716
  %v999 = vunpack.c.h.b16 %v716
  %v1000 = vunpack.c.l.b16 %v717
  %v1001 = vunpack.c.h.b16 %v717
  %v1002 = vunpack.c.l.b16 %v718
  %v1003 = vunpack.c.h.b16 %v718
  %v1004 = vunpack.c.l.b16 %v719
  %v1005 = vunpack.c.h.b16 %v719
  %v1006 = vunpack.c.l.b16 %v720
  %v1007 = vunpack.c.h.b16 %v720
  %v1008 = vunpack.c.l.b16 %v721
  %v1009 = vunpack.c.h.b16 %v721
  %v1010 = vunpack.c.l.b16 %v722
  %v1011 = vunpack.c.h.b16 %v722
  %v1012 = vunpack.c.l.b16 %v723
  %v1013 = vunpack.c.h.b16 %v723
  %v1014 = vunpack.c.l.b16 %v724
  %v1015 = vunpack.c.h.b16 %v724
  %v1016 = vunpack.c.l.b16 %v725
  %v1017 = vunpack.c.h.b16 %v725
  %v1018 = vunpack.c.l.b16 %v726
  %v1019 = vunpack.c.h.b16 %v726
  %v1020 = vunpack.c.l.b16 %v727
  %v1021 = vunpack.c.h.b16 %v727
  %v1022 = vunpack.c.l.b16 %v728
  %v1023 = vunpack.c.h.b16 %v728
  %v1024 = vunpack.c.l.b16 %v729
  %v1025 = vunpack.c.h.b16 %v729
  %v1026 = vunpack.c.l.b16 %v730
  %v1027 = vunpack.c.h.b16 %v730
  %v1028 = vunpack.c.l.b16 %v731
  %v1029 = vunpack.c.h.b16 %v731
  %v1030 = vunpack.c.l.b16 %v732
  %v1031 = vunpack.c.h.b16 %v732
  %v1032 = vunpack.c.l.b16 %v733
  %v1033 = vunpack.c.h.b16 %v733
  %v1034 = vunpack.c.l.b16 %v734
  %v1035 = vunpack.c.h.b16 %v734
  %v1036 = vunpack.c.l.b16 %v735
  %v1037 = vunpack.c.h.b16 %v735
  %v1038 = vunpack.c.l.b16 %v736
  %v1039 = vunpack.c.h.b16 %v736
  %v1040 = vunpack.c.l.b16 %v737
  %v1041 = vunpack.c.h.b16 %v737
  %v1042 = vunpack.c.l.b16 %v738
  %v1043 = vunpack.c.h.b16 %v738
  %v1044 = vunpack.c.l.b16 %v739
  %v1045 = vunpack.c.h.b16 %v739
  %v1046 = vunpack.c.l.b16 %v740
  %v1047 = vunpack.c.h.b16 %v740
  %v1048 = vunpack.c.l.b16 %v741
  %v1049 = vunpack.c.h.b16 %v741
  %v1050 = vunpack.c.l.b16 %v742
  %v1051 = vunpack.c.h.b16 %v742
  %v1052 = vunpack.c.l.b16 %v743
  %v1053 = vunpack.c.h.b16 %v743
  %v1054 = vunpack.c.l.b16 %v744
  %v1055 = vunpack.c.h.b16 %v744
  %v1056 = vunpack.c.l.b16 %v745
  %v1057 = vunpack.c.h.b16 %v745
  %v1058 = vunpack.c.l.b16 %v746
  %v1059 = vunpack.c.h.b16 %v746
  %v1060 = vunpack.c.l.b16 %v747
  %v1061 = vunpack.c.h.b16 %v747
  %v1062 = vunpack.c.l.b16 %v748
  %v1063 = vunpack.c.h.b16 %v748
  %v1064 = vunpack.c.l.b16 %v749
  %v1065 = vunpack.c.h.b16 %v749
  %v1066 = vunpack.c.l.b16 %v750
  %v1067 = vunpack.c.h.b16 %v750
  %v1068 = vunpack.c.l.b16 %v751
  %v1069 = vunpack.c.h.b16 %v751
  %v1070 = vunpack.c.l.b16 %v752
  %v1071 = vunpack.c.h.b16 %v752
  %v1072 = vunpack.c.l.b16 %v753
  %v1073 = vunpack.c.h.b16 %v753
  %v1074 = vunpack.c.l.b16 %v754
  %v1075 = vunpack.c.h.b16 %v754
  %v1076 = vunpack.c.l.b16 %v755
  %v1077 = vunpack.c.h.b16 %v755
  %v1078 = vunpack.c.l.b16 %v756
  %v1079 = vunpack.c.h.b16 %v756
  %v1080 = vunpack.c.l.b16 %v757
  %v1081 = vunpack.c.h.b16 %v757
  %v1082 = vunpack.c.l.b16 %v758
  %v1083 = vunpack.c.h.b16 %v758
  %v1084 = vunpack.c.l.b16 %v759
  %v1085 = vunpack.c.h.b16 %v759
  %v1086 = vunpack.c.l.b16 %v760
  %v1087 = vunpack.c.h.b16 %v760
  %v1088 = vunpack.c.l.b16 %v761
  %v1089 = vunpack.c.h.b16 %v761
  %v1090 = vunpack.c.l.b16 %v762
  %v1091 = vunpack.c.h.b16 %v762
  %v1092 = vunpack.c.l.b16 %v763
  %v1093 = vunpack.c.h.b16 %v763
  %v1094 = vunpack.c.l.b16 %v764
  %v1095 = vunpack.c.h.b16 %v764
  %v1096 = vunpack.c.l.b16 %v765
  %v1097 = vunpack.c.h.b16 %v765
  %v1098 = vunpack.c.l.b16 %v766
  %v1099 = vunpack.c.h.b16 %v766
  %v1100 = vunpack.c.l.b16 %v767
  %v1101 = vunpack.c.h.b16 %v767
  %v1102 = vunpack.c.l.b16 %v768
  %v1103 = vunpack.c.h.b16 %v768
  %v1104 = vunpack.c.l.b16 %v769
  %v1105 = vunpack.c.h.b16 %v769
  %v1106 = vunpack.c.l.b16 %v770
  %v1107 = vunpack.c.h.b16 %v770
  %v1108 = vunpack.c.l.b16 %v771
  %v1109 = vunpack.c.h.b16 %v771
  %v1110 = vunpack.c.l.b16 %v772
  %v1111 = vunpack.c.h.b16 %v772
  %v1112 = vunpack.c.l.b16 %v773
  %v1113 = vunpack.c.h.b16 %v773
  %v1114 = vunpack.c.l.b16 %v774
  %v1115 = vunpack.c.h.b16 %v774
  %v1116 = vunpack.c.l.b16 %v775
  %v1117 = vunpack.c.h.b16 %v775
  %v1118 = vunpack.c.l.b16 %v776
  %v1119 = vunpack.c.h.b16 %v776
  %v1120 = vunpack.c.l.b16 %v777
  %v1121 = vunpack.c.h.b16 %v777
  %v1122 = vunpack.c.l.b16 %v778
  %v1123 = vunpack.c.h.b16 %v778
  %v1124 = vunpack.c.l.b16 %v779
  %v1125 = vunpack.c.h.b16 %v779
  %v1126 = vunpack.c.l.b16 %v780
  %v1127 = vunpack.c.h.b16 %v780
  %v1128 = vunpack.c.l.b16 %v781
  %v1129 = vunpack.c.h.b16 %v781
  %v1130 = vunpack.c.l.b16 %v782
  %v1131 = vunpack.c.h.b16 %v782
  %v1132 = vunpack.c.l.b16 %v783
  %v1133 = vunpack.c.h.b16 %v783
  %v1134 = vunpack.c.l.b16 %v784
  %v1135 = vunpack.c.h.b16 %v784
  %v1136 = vunpack.c.l.b16 %v785
  %v1137 = vunpack.c.h.b16 %v785
  %v1138 = vunpack.c.l.b16 %v786
  %v1139 = vunpack.c.h.b16 %v786
  %v1140 = vunpack.c.l.b16 %v787
  %v1141 = vunpack.c.h.b16 %v787
  %v1142 = vunpack.c.l.b16 %v788
  %v1143 = vunpack.c.h.b16 %v788
  %v1144 = vunpack.c.l.b16 %v789
  %v1145 = vunpack.c.h.b16 %v789
  %v1146 = vunpack.c.l.b16 %v790
  %v1147 = vunpack.c.h.b16 %v790
  %v1148 = vunpack.c.l.b16 %v791
  %v1149 = vunpack.c.h.b16 %v791
  %v1150 = vunpack.c.l.b16 %v792
  %v1151 = vunpack.c.h.b16 %v792
  %v1152 = vunpack.c.l.b16 %v793
  %v1153 = vunpack.c.h.b16 %v793
  %v1154 = vunpack.c.l.b16 %v794
  %v1155 = vunpack.c.h.b16 %v794
  %v1156 = vunpack.c.l.b16 %v795
  %v1157 = vunpack.c.h.b16 %v795
  %v1158 = vunpack.c.l.b16 %v796
  %v1159 = vunpack.c.h.b16 %v796
  %v1160 = vunpack.c.l.b16 %v797
  %v1161 = vunpack.c.h.b16 %v797
  %v1162 = vunpack.c.l.b16 %v798
  %v1163 = vunpack.c.h.b16 %v798
  %v1164 = vunpack.c.l.b16 %v799
  %v1165 = vunpack.c.h.b16 %v799
  %v1166 = vunpack.c.l.b16 %v800
  %v1167 = vunpack.c.h.b16 %v800
  %v1168 = vunpack.c.l.b16 %v801
  %v1169 = vunpack.c.h.b16 %v801
  %v1170 = vunpack.c.l.b16 %v802
  %v1171 = vunpack.c.h.b16 %v802
  %v1172 = vunpack.c.l.b16 %v803
  %v1173 = vunpack.c.h.b16 %v803
  %v1174 = vunpack.c.l.b16 %v804
  %v1175 = vunpack.c.h.b16 %v804
  %v1176 = vunpack.c.l.b16 %v805
  %v1177 = vunpack.c.h.b16 %v805
  %v1178 = vunpack.c.l.b16 %v806
  %v1179 = vunpack.c.h.b16 %v806
  %v1180 = vunpack.c.l.b16 %v807
  %v1181 = vunpack.c.h.b16 %v807
  %v1182 = vunpack.c.l.b16 %v808
  %v1183 = vunpack.c.h.b16 %v808
  %v1184 = vunpack.c.l.b16 %v809
  %v1185 = vunpack.c.h.b16 %v809
  %v1186 = vunpack.c.l.b16 %v810
  %v1187 = vunpack.c.h.b16 %v810
  %v1188 = vunpack.c.l.b16 %v811
  %v1189 = vunpack.c.h.b16 %v811
  %v1190 = vunpack.c.l.b16 %v812
  %v1191 = vunpack.c.h.b16 %v812
  %v1192 = vunpack.c.l.b16 %v813
  %v1193 = vunpack.c.h.b16 %v813
  %v1194 = vunpack.c.l.b16 %v814
  %v1195 = vunpack.c.h.b16 %v814
  %v1196 = vunpack.c.l.b16 %v815
  %v1197 = vunpack.c.h.b16 %v815
  %v1198 = vunpack.c.l.b16 %v816
  %v1199 = vunpack.c.h.b16 %v816
  %v1200 = vunpack.c.l.b16 %v817
  %v1201 = vunpack.c.h.b16 %v817
  %v1202 = vunpack.c.l.b16 %v818
  %v1203 = vunpack.c.h.b16 %v818
  %v1204 = vunpack.c.l.b16 %v819
  %v1205 = vunpack.c.h.b16 %v819
  %v1206 = vunpack.c.l.b16 %v820
  %v1207 = vunpack.c.h.b16 %v820
  %v1208 = vunpack.c.l.b16 %v821
  %v1209 = vunpack.c.h.b16 %v821
  %v1210 = vunpack.c.l.b16 %v822
  %v1211 = vunpack.c.h.b16 %v822
  %v1212 = vunpack.c.l.b16 %v823
  %v1213 = vunpack.c.h.b16 %v823
  %v1214 = vunpack.c.l.b16 %v824
  %v1215 = vunpack.c.h.b16 %v824
  %v1216 = vunpack.c.l.b16 %v825
  %v1217 = vunpack.c.h.b16 %v825
  %v1218 = vunpack.c.l.b16 %v826
  %v1219 = vunpack.c.h.b16 %v826
  %v1220 = vunpack.c.l.b16 %v827
  %v1221 = vunpack.c.h.b16 %v827
  %v1222 = vunpack.c.l.b16 %v828
  %v1223 = vunpack.c.h.b16 %v828
  %v1224 = vunpack.c.l.b16 %v829
  %v1225 = vunpack.c.h.b16 %v829
  %v1226 = vpack.c.b16 %v972, %v970
  %v1227 = vpack.c.b16 %v973, %v971
  %v1228 = vpack.c.b16 %v976, %v974
  %v1229 = vpack.c.b16 %v977, %v975
  %v1230 = vpack.c.b16 %v980, %v978
  %v1231 = vpack.c.b16 %v981, %v979
  %v1232 = vpack.c.b16 %v984, %v982
  %v1233 = vpack.c.b16 %v985, %v983
  %v1234 = vpack.c.b16 %v988, %v986
  %v1235 = vpack.c.b16 %v989, %v987
  %v1236 = vpack.c.b16 %v992, %v990
  %v1237 = vpack.c.b16 %v993, %v991
  %v1238 = vpack.c.b16 %v996, %v994
  %v1239 = vpack.c.b16 %v997, %v995
  %v1240 = vpack.c.b16 %v1000, %v998
  %v1241 = vpack.c.b16 %v1001, %v999
  %v1242 = vpack.c.b16 %v1004, %v1002
  %v1243 = vpack.c.b16 %v1005, %v1003
  %v1244 = vpack.c.b16 %v1008, %v1006
  %v1245 = vpack.c.b16 %v1009, %v1007
  %v1246 = vpack.c.b16 %v1012, %v1010
  %v1247 = vpack.c.b16 %v1013, %v1011
  %v1248 = vpack.c.b16 %v1016, %v1014
  %v1249 = vpack.c.b16 %v1017, %v1015
  %v1250 = vpack.c.b16 %v1020, %v1018
  %v1251 = vpack.c.b16 %v1021, %v1019
  %v1252 = vpack.c.b16 %v1024, %v1022
  %v1253 = vpack.c.b16 %v1025, %v1023
  %v1254 = vpack.c.b16 %v1028, %v1026
  %v1255 = vpack.c.b16 %v1029, %v1027
  %v1256 = vpack.c.b16 %v1032, %v1030
  %v1257 = vpack.c.b16 %v1033, %v1031
  %v1258 = vpack.c.b16 %v1036, %v1034
  %v1259 = vpack.c.b16 %v1037, %v1035
  %v1260 = vpack.c.b16 %v1040, %v1038
  %v1261 = vpack.c.b16 %v1041, %v1039
  %v1262 = vpack.c.b16 %v1044, %v1042
  %v1263 = vpack.c.b16 %v1045, %v1043
  %v1264 = vpack.c.b16 %v1048, %v1046
  %v1265 = vpack.c.b16 %v1049, %v1047
  %v1266 = vpack.c.b16 %v1052, %v1050
  %v1267 = vpack.c.b16 %v1053, %v1051
  %v1268 = vpack.c.b16 %v1056, %v1054
  %v1269 = vpack.c.b16 %v1057, %v1055
  %v1270 = vpack.c.b16 %v1060, %v1058
  %v1271 = vpack.c.b16 %v1061, %v1059
  %v1272 = vpack.c.b16 %v1064, %v1062
  %v1273 = vpack.c.b16 %v1065, %v1063
  %v1274 = vpack.c.b16 %v1068, %v1066
  %v1275 = vpack.c.b16 %v1069, %v1067
  %v1276 = vpack.c.b16 %v1072, %v1070
  %v1277 = vpack.c.b16 %v1073, %v1071
  %v1278 = vpack.c.b16 %v1076, %v1074
  %v1279 = vpack.c.b16 %v1077, %v1075
  %v1280 = vpack.c.b16 %v1080, %v1078
  %v1281 = vpack.c.b16 %v1081, %v1079
  %v1282 = vpack.c.b16 %v1084, %v1082
  %v1283 = vpack.c.b16 %v1085, %v1083
  %v1284 = vpack.c.b16 %v1088, %v1086
  %v1285 = vpack.c.b16 %v1089, %v1087
  %v1286 = vpack.c.b16 %v1092, %v1090
  %v1287 = vpack.c.b16 %v1093, %v1091
  %v1288 = vpack.c.b16 %v1096, %v1094
  %v1289 = vpack.c.b16 %v1097, %v1095
  %v1290 = vpack.c.b16 %v1100, %v1098
  %v1291 = vpack.c.b16 %v1101, %v1099
  %v1292 = vpack.c.b16 %v1104, %v1102
  %v1293 = vpack.c.b16 %v1105, %v1103
  %v1294 = vpack.c.b16 %v1108, %v1106
  %v1295 = vpack.c.b16 %v1109, %v1107
  %v1296 = vpack.c.b16 %v1112, %v1110
  %v1297 = vpack.c.b16 %v1113, %v1111
  %v1298 = vpack.c.b16 %v1116, %v1114
  %v1299 = vpack.c.b16 %v1117, %v1115
  %v1300 = vpack.c.b16 %v1120, %v1118
  %v1301 = vpack.c.b16 %v1121, %v1119
  %v1302 = vpack.c.b16 %v1124, %v1122
  %v1303 = vpack.c.b16 %v1125, %v1123
  %v1304 = vpack.c.b16 %v1128, %v1126
  %v1305 = vpack.c.b16 %v1129, %v1127
  %v1306 = vpack.c.b16 %v1132, %v1130
  %v1307 = vpack.c.b16 %v1133, %v1131
  %v1308 = vpack.c.b16 %v1136, %v1134
  %v1309 = vpack.c.b16 %v1137, %v1135
  %v1310 = vpack.c.b16 %v1140, %v1138
  %v1311 = vpack.c.b16 %v1141, %v1139
  %v1312 = vpack.c.b16 %v1144, %v1142
  %v1313 = vpack.c.b16 %v1145, %v1143
  %v1314 = vpack.c.b16 %v1148, %v1146
  %v1315 = vpack.c.b16 %v1149, %v1147
  %v1316 = vpack.c.b16 %v1152, %v1150
  %v1317 = vpack.c.b16 %v1153, %v1151
  %v1318 = vpack.c.b16 %v1156, %v1154
  %v1319 = vpack.c.b16 %v1157, %v1155
  %v1320 = vpack.c.b16 %v1160, %v1158
  %v1321 = vpack.c.b16 %v1161, %v1159
  %v1322 = vpack.c.b16 %v1164, %v1162
  %v1323 = vpack.c.b16 %v1165, %v1163
  %v1324 = vpack.c.b16 %v1168, %v1166
  %v1325 = vpack.c.b16 %v1169, %v1167
  %v1326 = vpack.c.b16 %v1172, %v1170
  %v1327 = vpack.c.b16 %v1173, %v1171
  %v1328 = vpack.c.b16 %v1176, %v1174
  %v1329 = vpack.c.b16 %v1177, %v1175
  %v1330 = vpack.c.b16 %v1180, %v1178
  %v1331 = vpack.c.b16 %v1181, %v1179
  %v1332 = vpack.c.b16 %v1184, %v1182
  %v1333 = vpack.c.b16 %v1185, %v1183
  %v1334 = vpack.c.b16 %v1188, %v1186
  %v1335 = vpack.c.b16 %v1189, %v1187
  %v1336 = vpack.c.b16 %v1192, %v1190
  %v1337 = vpack.c.b16 %v1193, %v1191
  %v1338 = vpack.c.b16 %v1196, %v1194
  %v1339 = vpack.c.b16 %v1197, %v1195
  %v1340 = vpack.c.b16 %v1200, %v1198
  %v1341 = vpack.c.b16 %v1201, %v1199
  %v1342 = vpack.c.b16 %v1204, %v1202
  %v1343 = vpack.c.b16 %v1205, %v1203
  %v1344 = vpack.c.b16 %v1208, %v1206
  %v1345 = vpack.c.b16 %v1209, %v1207
  %v1346 = vpack.c.b16 %v1212, %v1210
  %v1347 = vpack.c.b16 %v1213, %v1211
  %v1348 = vpack.c.b16 %v1216, %v1214
  %v1349 = vpack.c.b16 %v1217, %v1215
  %v1350 = vpack.c.b16 %v1220, %v1218
  %v1351 = vpack.c.b16 %v1221, %v1219
  %v1352 = vpack.c.b16 %v1224, %v1222
  %v1353 = vpack.c.b16 %v1225, %v1223
  %1482 = vmatprep.subr.bf16.mxu0 %v1227
  %1483 = vmatpush1.bf16.msra.mxu0 %v1226
  %1484 = vmatprep.subr.bf16.mxu0 %v1229
  %1485 = vmatpush1.bf16.msra.mxu0 %v1228
  %1486 = vmatprep.subr.bf16.mxu0 %v1231
  %1487 = vmatpush1.bf16.msra.mxu0 %v1230
  %1488 = vmatprep.subr.bf16.mxu0 %v1233
  %1489 = vmatpush1.bf16.msra.mxu0 %v1232
  %1490 = vmatprep.subr.bf16.mxu0 %v1235
  %1491 = vmatpush1.bf16.msra.mxu0 %v1234
  %1492 = vmatprep.subr.bf16.mxu0 %v1237
  %1493 = vmatpush1.bf16.msra.mxu0 %v1236
  %1494 = vmatprep.subr.bf16.mxu0 %v1239
  %1495 = vmatpush1.bf16.msra.mxu0 %v1238
  %1496 = vmatprep.subr.bf16.mxu0 %v1241
  %1497 = vmatpush1.bf16.msra.mxu0 %v1240
  %1498 = vmatprep.subr.bf16.mxu0 %v1243
  %1499 = vmatpush1.bf16.msra.mxu0 %v1242
  %1500 = vmatprep.subr.bf16.mxu0 %v1245
  %1501 = vmatpush1.bf16.msra.mxu0 %v1244
  %1502 = vmatprep.subr.bf16.mxu0 %v1247
  %1503 = vmatpush1.bf16.msra.mxu0 %v1246
  %1504 = vmatprep.subr.bf16.mxu0 %v1249
  %1505 = vmatpush1.bf16.msra.mxu0 %v1248
  %1506 = vmatprep.subr.bf16.mxu0 %v1251
  %1507 = vmatpush1.bf16.msra.mxu0 %v1250
  %1508 = vmatprep.subr.bf16.mxu0 %v1253
  %1509 = vmatpush1.bf16.msra.mxu0 %v1252
  %1510 = vmatprep.subr.bf16.mxu0 %v1255
  %1511 = vmatpush1.bf16.msra.mxu0 %v1254
  %1512 = vmatprep.subr.bf16.mxu0 %v1257
  %1513 = vmatpush1.bf16.msra.mxu0 %v1256
  %1514 = vmatprep.mubr.bf16.mxu0 %v695
  %1515 = vmatmul.mubr.bf16.gmra.mrb[0].mxu0 %v694
  %v1516 = vpop.f32.mrb[0].mxu0
  %v1517 = vadd.f32 %v835, %v1516
  %v1518 = vpop.f32.mrb[0].mxu0
  %v1519 = vadd.f32 %v839, %v1518
  %v1520 = vpop.f32.mrb[0].mxu0
  %v1521 = vpop.f32.mrb[0].mxu0
  %1522 = vdwg.mxu0
  %1523 = vmatprep.subr.bf16.mxu0 %v1259
  %1524 = vmatpush1.bf16.msra.mxu0 %v1258
  %1525 = vmatprep.subr.bf16.mxu0 %v1261
  %1526 = vmatpush1.bf16.msra.mxu0 %v1260
  %1527 = vmatprep.subr.bf16.mxu0 %v1263
  %1528 = vmatpush1.bf16.msra.mxu0 %v1262
  %1529 = vmatprep.subr.bf16.mxu0 %v1265
  %1530 = vmatpush1.bf16.msra.mxu0 %v1264
  %1531 = vmatprep.subr.bf16.mxu0 %v1267
  %1532 = vmatpush1.bf16.msra.mxu0 %v1266
  %1533 = vmatprep.subr.bf16.mxu0 %v1269
  %1534 = vmatpush1.bf16.msra.mxu0 %v1268
  %1535 = vmatprep.subr.bf16.mxu0 %v1271
  %1536 = vmatpush1.bf16.msra.mxu0 %v1270
  %1537 = vmatprep.subr.bf16.mxu0 %v1273
  %1538 = vmatpush1.bf16.msra.mxu0 %v1272
  %1539 = vmatprep.subr.bf16.mxu0 %v1275
  %1540 = vmatpush1.bf16.msra.mxu0 %v1274
  %1541 = vmatprep.subr.bf16.mxu0 %v1277
  %1542 = vmatpush1.bf16.msra.mxu0 %v1276
  %1543 = vmatprep.subr.bf16.mxu0 %v1279
  %1544 = vmatpush1.bf16.msra.mxu0 %v1278
  %1545 = vmatprep.subr.bf16.mxu0 %v1281
  %1546 = vmatpush1.bf16.msra.mxu0 %v1280
  %1547 = vmatprep.subr.bf16.mxu0 %v1283
  %1548 = vmatpush1.bf16.msra.mxu0 %v1282
  %1549 = vmatprep.subr.bf16.mxu0 %v1285
  %1550 = vmatpush1.bf16.msra.mxu0 %v1284
  %1551 = vmatprep.subr.bf16.mxu0 %v1287
  %1552 = vmatpush1.bf16.msra.mxu0 %v1286
  %1553 = vmatprep.subr.bf16.mxu0 %v1289
  %1554 = vmatpush1.bf16.msra.mxu0 %v1288
  %1555 = vmatprep.mubr.bf16.mxu0 %v697
  %1556 = vmatmul.mubr.bf16.gmra.mrb[0].mxu0 %v696
  %v1557 = vpop.f32.mrb[0].mxu0
  %v1558 = vadd.f32 %v1517, %v1557
  %v1559 = vpop.f32.mrb[0].mxu0
  %v1560 = vadd.f32 %v1519, %v1559
  %v1561 = vpop.f32.mrb[0].mxu0
  %v1562 = vpop.f32.mrb[0].mxu0
  %1563 = vdwg.mxu0
  %1564 = vmatprep.subr.bf16.mxu0 %v1291
  %1565 = vmatpush1.bf16.msra.mxu0 %v1290
  %1566 = vmatprep.subr.bf16.mxu0 %v1293
  %1567 = vmatpush1.bf16.msra.mxu0 %v1292
  %1568 = vmatprep.subr.bf16.mxu0 %v1295
  %1569 = vmatpush1.bf16.msra.mxu0 %v1294
  %1570 = vmatprep.subr.bf16.mxu0 %v1297
  %1571 = vmatpush1.bf16.msra.mxu0 %v1296
  %1572 = vmatprep.subr.bf16.mxu0 %v1299
  %1573 = vmatpush1.bf16.msra.mxu0 %v1298
  %1574 = vmatprep.subr.bf16.mxu0 %v1301
  %1575 = vmatpush1.bf16.msra.mxu0 %v1300
  %1576 = vmatprep.subr.bf16.mxu0 %v1303
  %1577 = vmatpush1.bf16.msra.mxu0 %v1302
  %1578 = vmatprep.subr.bf16.mxu0 %v1305
  %1579 = vmatpush1.bf16.msra.mxu0 %v1304
  %1580 = vmatprep.subr.bf16.mxu0 %v1307
  %1581 = vmatpush1.bf16.msra.mxu0 %v1306
  %1582 = vmatprep.subr.bf16.mxu0 %v1309
  %1583 = vmatpush1.bf16.msra.mxu0 %v1308
  %1584 = vmatprep.subr.bf16.mxu0 %v1311
  %1585 = vmatpush1.bf16.msra.mxu0 %v1310
  %1586 = vmatprep.subr.bf16.mxu0 %v1313
  %1587 = vmatpush1.bf16.msra.mxu0 %v1312
  %1588 = vmatprep.subr.bf16.mxu0 %v1315
  %1589 = vmatpush1.bf16.msra.mxu0 %v1314
  %1590 = vmatprep.subr.bf16.mxu0 %v1317
  %1591 = vmatpush1.bf16.msra.mxu0 %v1316
  %1592 = vmatprep.subr.bf16.mxu0 %v1319
  %1593 = vmatpush1.bf16.msra.mxu0 %v1318
  %1594 = vmatprep.subr.bf16.mxu0 %v1321
  %1595 = vmatpush1.bf16.msra.mxu0 %v1320
  %1596 = vmatprep.mubr.bf16.mxu0 %v699
  %1597 = vmatmul.mubr.bf16.gmra.mrb[0].mxu0 %v698
  %v1598 = vpop.f32.mrb[0].mxu0
  %v1599 = vadd.f32 %v1558, %v1598
  %v1600 = vpop.f32.mrb[0].mxu0
  %v1601 = vadd.f32 %v1560, %v1600
  %v1602 = vpop.f32.mrb[0].mxu0
  %v1603 = vpop.f32.mrb[0].mxu0
  %1604 = vdwg.mxu0
  %1605 = vmatprep.subr.bf16.mxu0 %v1323
  %1606 = vmatpush1.bf16.msra.mxu0 %v1322
  %1607 = vmatprep.subr.bf16.mxu0 %v1325
  %1608 = vmatpush1.bf16.msra.mxu0 %v1324
  %1609 = vmatprep.subr.bf16.mxu0 %v1327
  %1610 = vmatpush1.bf16.msra.mxu0 %v1326
  %1611 = vmatprep.subr.bf16.mxu0 %v1329
  %1612 = vmatpush1.bf16.msra.mxu0 %v1328
  %1613 = vmatprep.subr.bf16.mxu0 %v1331
  %1614 = vmatpush1.bf16.msra.mxu0 %v1330
  %1615 = vmatprep.subr.bf16.mxu0 %v1333
  %1616 = vmatpush1.bf16.msra.mxu0 %v1332
  %1617 = vmatprep.subr.bf16.mxu0 %v1335
  %1618 = vmatpush1.bf16.msra.mxu0 %v1334
  %1619 = vmatprep.subr.bf16.mxu0 %v1337
  %1620 = vmatpush1.bf16.msra.mxu0 %v1336
  %1621 = vmatprep.subr.bf16.mxu0 %v1339
  %1622 = vmatpush1.bf16.msra.mxu0 %v1338
  %1623 = vmatprep.subr.bf16.mxu0 %v1341
  %1624 = vmatpush1.bf16.msra.mxu0 %v1340
  %1625 = vmatprep.subr.bf16.mxu0 %v1343
  %1626 = vmatpush1.bf16.msra.mxu0 %v1342
  %1627 = vmatprep.subr.bf16.mxu0 %v1345
  %1628 = vmatpush1.bf16.msra.mxu0 %v1344
  %1629 = vmatprep.subr.bf16.mxu0 %v1347
  %1630 = vmatpush1.bf16.msra.mxu0 %v1346
  %1631 = vmatprep.subr.bf16.mxu0 %v1349
  %1632 = vmatpush1.bf16.msra.mxu0 %v1348
  %1633 = vmatprep.subr.bf16.mxu0 %v1351
  %1634 = vmatpush1.bf16.msra.mxu0 %v1350
  %1635 = vmatprep.subr.bf16.mxu0 %v1353
  %1636 = vmatpush1.bf16.msra.mxu0 %v1352
  %1637 = vmatprep.mubr.bf16.mxu0 %v701
  %1638 = vmatmul.mubr.bf16.gmra.mrb[0].mxu0 %v700
  %v1639 = vpop.f32.mrb[0].mxu0
  %v1640 = vadd.f32 %v1599, %v1639
  %v1641 = vpop.f32.mrb[0].mxu0
  %v1642 = vadd.f32 %v1601, %v1641
  %v1643 = vpop.f32.mrb[0].mxu0
  %v1644 = vpop.f32.mrb[0].mxu0
  %1645 = vdwg.mxu0
  %v1646 = vmax.f32 %v1640, 0.0
  %v1647 = vmax.f32 %v1642, 0.0
  %v1648 = vpack.c.bf16 %v1646, %v1646
  %v1649 = vpack.c.bf16 %v1647, %v1647
  %v1650 = vld [vmem:[%s5] sm:$0xff]
  %v1651 = vld [vmem:[%s5 + $0x8] sm:$0xff]
  %v1652 = vld [vmem:[%s5 + $0x10] sm:$0xff]
  %v1653 = vld [vmem:[%s5 + $0x18] sm:$0xff]
  %v1654 = vld [vmem:[%s5 + $0x20] sm:$0xff]
  %v1655 = vld [vmem:[%s5 + $0x28] sm:$0xff]
  %v1656 = vld [vmem:[%s5 + $0x30] sm:$0xff]
  %v1657 = vld [vmem:[%s5 + $0x38] sm:$0xff]
  %v1658 = vld [vmem:[%s5 + $0x40] sm:$0xff]
  %v1659 = vld [vmem:[%s5 + $0x48] sm:$0xff]
  %v1660 = vld [vmem:[%s5 + $0x50] sm:$0xff]
  %v1661 = vld [vmem:[%s5 + $0x58] sm:$0xff]
  %v1662 = vld [vmem:[%s5 + $0x60] sm:$0xff]
  %v1663 = vld [vmem:[%s5 + $0x68] sm:$0xff]
  %v1664 = vld [vmem:[%s5 + $0x70] sm:$0xff]
  %v1665 = vld [vmem:[%s5 + $0x78] sm:$0xff]
  %v1666 = vld [vmem:[%s5 + $0x80] sm:$0xff]
  %v1667 = vld [vmem:[%s5 + $0x88] sm:$0xff]
  %v1668 = vld [vmem:[%s5 + $0x90] sm:$0xff]
  %v1669 = vld [vmem:[%s5 + $0x98] sm:$0xff]
  %v1670 = vld [vmem:[%s5 + $0xa0] sm:$0xff]
  %v1671 = vld [vmem:[%s5 + $0xa8] sm:$0xff]
  %v1672 = vld [vmem:[%s5 + $0xb0] sm:$0xff]
  %v1673 = vld [vmem:[%s5 + $0xb8] sm:$0xff]
  %v1674 = vld [vmem:[%s5 + $0xc0] sm:$0xff]
  %v1675 = vld [vmem:[%s5 + $0xc8] sm:$0xff]
  %v1676 = vld [vmem:[%s5 + $0xd0] sm:$0xff]
  %v1677 = vld [vmem:[%s5 + $0xd8] sm:$0xff]
  %v1678 = vld [vmem:[%s5 + $0xe0] sm:$0xff]
  %v1679 = vld [vmem:[%s5 + $0xe8] sm:$0xff]
  %v1680 = vld [vmem:[%s5 + $0xf0] sm:$0xff]
  %v1681 = vld [vmem:[%s5 + $0xf8] sm:$0xff]
  %v1682 = vld [vmem:[%s6] sm:$0x3]
  %v1684 = vlaneseq
  %v1685 = vshrl.u32 %v1684, 7
  %v1686 = vsub.s32 0, %v1685
  %v1687 = vrot.slane %v1682, %v1686
  %v1688 = vlaneseq
  %v1689 = vshrl.u32 %v1688, 7
  %v1690 = vsub.s32 1, %v1689
  %v1691 = vrot.slane %v1682, %v1690
  %v1726 = vunpack.c.l.b16 %v1650
  %v1727 = vunpack.c.h.b16 %v1650
  %v1728 = vunpack.c.l.b16 %v1651
  %v1729 = vunpack.c.h.b16 %v1651
  %v1730 = vunpack.c.l.b16 %v1652
  %v1731 = vunpack.c.h.b16 %v1652
  %v1732 = vunpack.c.l.b16 %v1653
  %v1733 = vunpack.c.h.b16 %v1653
  %v1734 = vunpack.c.l.b16 %v1654
  %v1735 = vunpack.c.h.b16 %v1654
  %v1736 = vunpack.c.l.b16 %v1655
  %v1737 = vunpack.c.h.b16 %v1655
  %v1738 = vunpack.c.l.b16 %v1656
  %v1739 = vunpack.c.h.b16 %v1656
  %v1740 = vunpack.c.l.b16 %v1657
  %v1741 = vunpack.c.h.b16 %v1657
  %v1742 = vunpack.c.l.b16 %v1658
  %v1743 = vunpack.c.h.b16 %v1658
  %v1744 = vunpack.c.l.b16 %v1659
  %v1745 = vunpack.c.h.b16 %v1659
  %v1746 = vunpack.c.l.b16 %v1660
  %v1747 = vunpack.c.h.b16 %v1660
  %v1748 = vunpack.c.l.b16 %v1661
  %v1749 = vunpack.c.h.b16 %v1661
  %v1750 = vunpack.c.l.b16 %v1662
  %v1751 = vunpack.c.h.b16 %v1662
  %v1752 = vunpack.c.l.b16 %v1663
  %v1753 = vunpack.c.h.b16 %v1663
  %v1754 = vunpack.c.l.b16 %v1664
  %v1755 = vunpack.c.h.b16 %v1664
  %v1756 = vunpack.c.l.b16 %v1665
  %v1757 = vunpack.c.h.b16 %v1665
  %v1758 = vunpack.c.l.b16 %v1666
  %v1759 = vunpack.c.h.b16 %v1666
  %v1760 = vunpack.c.l.b16 %v1667
  %v1761 = vunpack.c.h.b16 %v1667
  %v1762 = vunpack.c.l.b16 %v1668
  %v1763 = vunpack.c.h.b16 %v1668
  %v1764 = vunpack.c.l.b16 %v1669
  %v1765 = vunpack.c.h.b16 %v1669
  %v1766 = vunpack.c.l.b16 %v1670
  %v1767 = vunpack.c.h.b16 %v1670
  %v1768 = vunpack.c.l.b16 %v1671
  %v1769 = vunpack.c.h.b16 %v1671
  %v1770 = vunpack.c.l.b16 %v1672
  %v1771 = vunpack.c.h.b16 %v1672
  %v1772 = vunpack.c.l.b16 %v1673
  %v1773 = vunpack.c.h.b16 %v1673
  %v1774 = vunpack.c.l.b16 %v1674
  %v1775 = vunpack.c.h.b16 %v1674
  %v1776 = vunpack.c.l.b16 %v1675
  %v1777 = vunpack.c.h.b16 %v1675
  %v1778 = vunpack.c.l.b16 %v1676
  %v1779 = vunpack.c.h.b16 %v1676
  %v1780 = vunpack.c.l.b16 %v1677
  %v1781 = vunpack.c.h.b16 %v1677
  %v1782 = vunpack.c.l.b16 %v1678
  %v1783 = vunpack.c.h.b16 %v1678
  %v1784 = vunpack.c.l.b16 %v1679
  %v1785 = vunpack.c.h.b16 %v1679
  %v1786 = vunpack.c.l.b16 %v1680
  %v1787 = vunpack.c.h.b16 %v1680
  %v1788 = vunpack.c.l.b16 %v1681
  %v1789 = vunpack.c.h.b16 %v1681
  %v1790 = vpack.c.b16 %v1728, %v1726
  %v1791 = vpack.c.b16 %v1729, %v1727
  %v1792 = vpack.c.b16 %v1732, %v1730
  %v1793 = vpack.c.b16 %v1733, %v1731
  %v1794 = vpack.c.b16 %v1736, %v1734
  %v1795 = vpack.c.b16 %v1737, %v1735
  %v1796 = vpack.c.b16 %v1740, %v1738
  %v1797 = vpack.c.b16 %v1741, %v1739
  %v1798 = vpack.c.b16 %v1744, %v1742
  %v1799 = vpack.c.b16 %v1745, %v1743
  %v1800 = vpack.c.b16 %v1748, %v1746
  %v1801 = vpack.c.b16 %v1749, %v1747
  %v1802 = vpack.c.b16 %v1752, %v1750
  %v1803 = vpack.c.b16 %v1753, %v1751
  %v1804 = vpack.c.b16 %v1756, %v1754
  %v1805 = vpack.c.b16 %v1757, %v1755
  %v1806 = vpack.c.b16 %v1760, %v1758
  %v1807 = vpack.c.b16 %v1761, %v1759
  %v1808 = vpack.c.b16 %v1764, %v1762
  %v1809 = vpack.c.b16 %v1765, %v1763
  %v1810 = vpack.c.b16 %v1768, %v1766
  %v1811 = vpack.c.b16 %v1769, %v1767
  %v1812 = vpack.c.b16 %v1772, %v1770
  %v1813 = vpack.c.b16 %v1773, %v1771
  %v1814 = vpack.c.b16 %v1776, %v1774
  %v1815 = vpack.c.b16 %v1777, %v1775
  %v1816 = vpack.c.b16 %v1780, %v1778
  %v1817 = vpack.c.b16 %v1781, %v1779
  %v1818 = vpack.c.b16 %v1784, %v1782
  %v1819 = vpack.c.b16 %v1785, %v1783
  %v1820 = vpack.c.b16 %v1788, %v1786
  %v1821 = vpack.c.b16 %v1789, %v1787
  %1854 = vmatprep.subr.bf16.mxu0 %v1791
  %1855 = vmatpush1.bf16.msra.mxu0 %v1790
  %1856 = vmatprep.subr.bf16.mxu0 %v1793
  %1857 = vmatpush1.bf16.msra.mxu0 %v1792
  %1858 = vmatprep.subr.bf16.mxu0 %v1795
  %1859 = vmatpush1.bf16.msra.mxu0 %v1794
  %1860 = vmatprep.subr.bf16.mxu0 %v1797
  %1861 = vmatpush1.bf16.msra.mxu0 %v1796
  %1862 = vmatprep.subr.bf16.mxu0 %v1799
  %1863 = vmatpush1.bf16.msra.mxu0 %v1798
  %1864 = vmatprep.subr.bf16.mxu0 %v1801
  %1865 = vmatpush1.bf16.msra.mxu0 %v1800
  %1866 = vmatprep.subr.bf16.mxu0 %v1803
  %1867 = vmatpush1.bf16.msra.mxu0 %v1802
  %1868 = vmatprep.subr.bf16.mxu0 %v1805
  %1869 = vmatpush1.bf16.msra.mxu0 %v1804
  %1870 = vmatprep.subr.bf16.mxu0 %v1807
  %1871 = vmatpush1.bf16.msra.mxu0 %v1806
  %1872 = vmatprep.subr.bf16.mxu0 %v1809
  %1873 = vmatpush1.bf16.msra.mxu0 %v1808
  %1874 = vmatprep.subr.bf16.mxu0 %v1811
  %1875 = vmatpush1.bf16.msra.mxu0 %v1810
  %1876 = vmatprep.subr.bf16.mxu0 %v1813
  %1877 = vmatpush1.bf16.msra.mxu0 %v1812
  %1878 = vmatprep.subr.bf16.mxu0 %v1815
  %1879 = vmatpush1.bf16.msra.mxu0 %v1814
  %1880 = vmatprep.subr.bf16.mxu0 %v1817
  %1881 = vmatpush1.bf16.msra.mxu0 %v1816
  %1882 = vmatprep.subr.bf16.mxu0 %v1819
  %1883 = vmatpush1.bf16.msra.mxu0 %v1818
  %1884 = vmatprep.subr.bf16.mxu0 %v1821
  %1885 = vmatpush1.bf16.msra.mxu0 %v1820
  %1886 = vmatprep.mubr.bf16.mxu0 %v1649
  %1887 = vmatmul.mubr.bf16.gmra.mrb[0].mxu0 %v1648
  %v1888 = vpop.f32.mrb[0].mxu0
  %v1889 = vadd.f32 %v1687, %v1888
  %v1890 = vpop.f32.mrb[0].mxu0
  %v1891 = vadd.f32 %v1691, %v1890
  %v1892 = vpop.f32.mrb[0].mxu0
  %v1893 = vpop.f32.mrb[0].mxu0
  %1894 = vdwg.mxu0
  %v1895 = vmax.f32 %v1889, 0.0
  %v1896 = vmax.f32 %v1891, 0.0
  %v1897 = vpack.c.bf16 %v1895, %v1895
  %v1898 = vpack.c.bf16 %v1896, %v1896
  %v1899 = vld [vmem:[%s7] sm:$0xff]
  %v1900 = vld [vmem:[%s7 + $0x8] sm:$0xff]
  %v1901 = vld [vmem:[%s7 + $0x10] sm:$0xff]
  %v1902 = vld [vmem:[%s7 + $0x18] sm:$0xff]
  %v1903 = vld [vmem:[%s7 + $0x20] sm:$0xff]
  %v1904 = vld [vmem:[%s7 + $0x28] sm:$0xff]
  %v1905 = vld [vmem:[%s7 + $0x30] sm:$0xff]
  %v1906 = vld [vmem:[%s7 + $0x38] sm:$0xff]
  %v1907 = vld [vmem:[%s7 + $0x40] sm:$0xff]
  %v1908 = vld [vmem:[%s7 + $0x48] sm:$0xff]
  %v1909 = vld [vmem:[%s7 + $0x50] sm:$0xff]
  %v1910 = vld [vmem:[%s7 + $0x58] sm:$0xff]
  %v1911 = vld [vmem:[%s7 + $0x60] sm:$0xff]
  %v1912 = vld [vmem:[%s7 + $0x68] sm:$0xff]
  %v1913 = vld [vmem:[%s7 + $0x70] sm:$0xff]
  %v1914 = vld [vmem:[%s7 + $0x78] sm:$0xff]
  %v1915 = vld [vmem:[%s7 + $0x80] sm:$0xff]
  %v1916 = vld [vmem:[%s7 + $0x88] sm:$0xff]
  %v1917 = vld [vmem:[%s7 + $0x90] sm:$0xff]
  %v1918 = vld [vmem:[%s7 + $0x98] sm:$0xff]
  %v1919 = vld [vmem:[%s7 + $0xa0] sm:$0xff]
  %v1920 = vld [vmem:[%s7 + $0xa8] sm:$0xff]
  %v1921 = vld [vmem:[%s7 + $0xb0] sm:$0xff]
  %v1922 = vld [vmem:[%s7 + $0xb8] sm:$0xff]
  %v1923 = vld [vmem:[%s7 + $0xc0] sm:$0xff]
  %v1924 = vld [vmem:[%s7 + $0xc8] sm:$0xff]
  %v1925 = vld [vmem:[%s7 + $0xd0] sm:$0xff]
  %v1926 = vld [vmem:[%s7 + $0xd8] sm:$0xff]
  %v1927 = vld [vmem:[%s7 + $0xe0] sm:$0xff]
  %v1928 = vld [vmem:[%s7 + $0xe8] sm:$0xff]
  %v1929 = vld [vmem:[%s7 + $0xf0] sm:$0xff]
  %v1930 = vld [vmem:[%s7 + $0xf8] sm:$0xff]
  %v1931 = vld [vmem:[%s8] sm:$0x3]
  %v1933 = vlaneseq
  %v1934 = vshrl.u32 %v1933, 7
  %v1935 = vsub.s32 0, %v1934
  %v1936 = vrot.slane %v1931, %v1935
  %v1937 = vlaneseq
  %v1938 = vshrl.u32 %v1937, 7
  %v1939 = vsub.s32 1, %v1938
  %v1940 = vrot.slane %v1931, %v1939
  %v1975 = vunpack.c.l.b16 %v1899
  %v1976 = vunpack.c.h.b16 %v1899
  %v1977 = vunpack.c.l.b16 %v1900
  %v1978 = vunpack.c.h.b16 %v1900
  %v1979 = vunpack.c.l.b16 %v1901
  %v1980 = vunpack.c.h.b16 %v1901
  %v1981 = vunpack.c.l.b16 %v1902
  %v1982 = vunpack.c.h.b16 %v1902
  %v1983 = vunpack.c.l.b16 %v1903
  %v1984 = vunpack.c.h.b16 %v1903
  %v1985 = vunpack.c.l.b16 %v1904
  %v1986 = vunpack.c.h.b16 %v1904
  %v1987 = vunpack.c.l.b16 %v1905
  %v1988 = vunpack.c.h.b16 %v1905
  %v1989 = vunpack.c.l.b16 %v1906
  %v1990 = vunpack.c.h.b16 %v1906
  %v1991 = vunpack.c.l.b16 %v1907
  %v1992 = vunpack.c.h.b16 %v1907
  %v1993 = vunpack.c.l.b16 %v1908
  %v1994 = vunpack.c.h.b16 %v1908
  %v1995 = vunpack.c.l.b16 %v1909
  %v1996 = vunpack.c.h.b16 %v1909
  %v1997 = vunpack.c.l.b16 %v1910
  %v1998 = vunpack.c.h.b16 %v1910
  %v1999 = vunpack.c.l.b16 %v1911
  %v2000 = vunpack.c.h.b16 %v1911
  %v2001 = vunpack.c.l.b16 %v1912
  %v2002 = vunpack.c.h.b16 %v1912
  %v2003 = vunpack.c.l.b16 %v1913
  %v2004 = vunpack.c.h.b16 %v1913
  %v2005 = vunpack.c.l.b16 %v1914
  %v2006 = vunpack.c.h.b16 %v1914
  %v2007 = vunpack.c.l.b16 %v1915
  %v2008 = vunpack.c.h.b16 %v1915
  %v2009 = vunpack.c.l.b16 %v1916
  %v2010 = vunpack.c.h.b16 %v1916
  %v2011 = vunpack.c.l.b16 %v1917
  %v2012 = vunpack.c.h.b16 %v1917
  %v2013 = vunpack.c.l.b16 %v1918
  %v2014 = vunpack.c.h.b16 %v1918
  %v2015 = vunpack.c.l.b16 %v1919
  %v2016 = vunpack.c.h.b16 %v1919
  %v2017 = vunpack.c.l.b16 %v1920
  %v2018 = vunpack.c.h.b16 %v1920
  %v2019 = vunpack.c.l.b16 %v1921
  %v2020 = vunpack.c.h.b16 %v1921
  %v2021 = vunpack.c.l.b16 %v1922
  %v2022 = vunpack.c.h.b16 %v1922
  %v2023 = vunpack.c.l.b16 %v1923
  %v2024 = vunpack.c.h.b16 %v1923
  %v2025 = vunpack.c.l.b16 %v1924
  %v2026 = vunpack.c.h.b16 %v1924
  %v2027 = vunpack.c.l.b16 %v1925
  %v2028 = vunpack.c.h.b16 %v1925
  %v2029 = vunpack.c.l.b16 %v1926
  %v2030 = vunpack.c.h.b16 %v1926
  %v2031 = vunpack.c.l.b16 %v1927
  %v2032 = vunpack.c.h.b16 %v1927
  %v2033 = vunpack.c.l.b16 %v1928
  %v2034 = vunpack.c.h.b16 %v1928
  %v2035 = vunpack.c.l.b16 %v1929
  %v2036 = vunpack.c.h.b16 %v1929
  %v2037 = vunpack.c.l.b16 %v1930
  %v2038 = vunpack.c.h.b16 %v1930
  %v2039 = vpack.c.b16 %v1977, %v1975
  %v2040 = vpack.c.b16 %v1978, %v1976
  %v2041 = vpack.c.b16 %v1981, %v1979
  %v2042 = vpack.c.b16 %v1982, %v1980
  %v2043 = vpack.c.b16 %v1985, %v1983
  %v2044 = vpack.c.b16 %v1986, %v1984
  %v2045 = vpack.c.b16 %v1989, %v1987
  %v2046 = vpack.c.b16 %v1990, %v1988
  %v2047 = vpack.c.b16 %v1993, %v1991
  %v2048 = vpack.c.b16 %v1994, %v1992
  %v2049 = vpack.c.b16 %v1997, %v1995
  %v2050 = vpack.c.b16 %v1998, %v1996
  %v2051 = vpack.c.b16 %v2001, %v1999
  %v2052 = vpack.c.b16 %v2002, %v2000
  %v2053 = vpack.c.b16 %v2005, %v2003
  %v2054 = vpack.c.b16 %v2006, %v2004
  %v2055 = vpack.c.b16 %v2009, %v2007
  %v2056 = vpack.c.b16 %v2010, %v2008
  %v2057 = vpack.c.b16 %v2013, %v2011
  %v2058 = vpack.c.b16 %v2014, %v2012
  %v2059 = vpack.c.b16 %v2017, %v2015
  %v2060 = vpack.c.b16 %v2018, %v2016
  %v2061 = vpack.c.b16 %v2021, %v2019
  %v2062 = vpack.c.b16 %v2022, %v2020
  %v2063 = vpack.c.b16 %v2025, %v2023
  %v2064 = vpack.c.b16 %v2026, %v2024
  %v2065 = vpack.c.b16 %v2029, %v2027
  %v2066 = vpack.c.b16 %v2030, %v2028
  %v2067 = vpack.c.b16 %v2033, %v2031
  %v2068 = vpack.c.b16 %v2034, %v2032
  %v2069 = vpack.c.b16 %v2037, %v2035
  %v2070 = vpack.c.b16 %v2038, %v2036
  %2103 = vmatprep.subr.bf16.mxu0 %v2040
  %2104 = vmatpush1.bf16.msra.mxu0 %v2039
  %2105 = vmatprep.subr.bf16.mxu0 %v2042
  %2106 = vmatpush1.bf16.msra.mxu0 %v2041
  %2107 = vmatprep.subr.bf16.mxu0 %v2044
  %2108 = vmatpush1.bf16.msra.mxu0 %v2043
  %2109 = vmatprep.subr.bf16.mxu0 %v2046
  %2110 = vmatpush1.bf16.msra.mxu0 %v2045
  %2111 = vmatprep.subr.bf16.mxu0 %v2048
  %2112 = vmatpush1.bf16.msra.mxu0 %v2047
  %2113 = vmatprep.subr.bf16.mxu0 %v2050
  %2114 = vmatpush1.bf16.msra.mxu0 %v2049
  %2115 = vmatprep.subr.bf16.mxu0 %v2052
  %2116 = vmatpush1.bf16.msra.mxu0 %v2051
  %2117 = vmatprep.subr.bf16.mxu0 %v2054
  %2118 = vmatpush1.bf16.msra.mxu0 %v2053
  %2119 = vmatprep.subr.bf16.mxu0 %v2056
  %2120 = vmatpush1.bf16.msra.mxu0 %v2055
  %2121 = vmatprep.subr.bf16.mxu0 %v2058
  %2122 = vmatpush1.bf16.msra.mxu0 %v2057
  %2123 = vmatprep.subr.bf16.mxu0 %v2060
  %2124 = vmatpush1.bf16.msra.mxu0 %v2059
  %2125 = vmatprep.subr.bf16.mxu0 %v2062
  %2126 = vmatpush1.bf16.msra.mxu0 %v2061
  %2127 = vmatprep.subr.bf16.mxu0 %v2064
  %2128 = vmatpush1.bf16.msra.mxu0 %v2063
  %2129 = vmatprep.subr.bf16.mxu0 %v2066
  %2130 = vmatpush1.bf16.msra.mxu0 %v2065
  %2131 = vmatprep.subr.bf16.mxu0 %v2068
  %2132 = vmatpush1.bf16.msra.mxu0 %v2067
  %2133 = vmatprep.subr.bf16.mxu0 %v2070
  %2134 = vmatpush1.bf16.msra.mxu0 %v2069
  %2135 = vmatprep.mubr.bf16.mxu0 %v1898
  %2136 = vmatmul.mubr.bf16.gmra.mrb[0].mxu0 %v1897
  %v2137 = vpop.f32.mrb[0].mxu0
  %v2138 = vadd.f32 %v1936, %v2137
  %v2139 = vpop.f32.mrb[0].mxu0
  %v2140 = vadd.f32 %v1940, %v2139
  %v2141 = vpop.f32.mrb[0].mxu0
  %v2142 = vpop.f32.mrb[0].mxu0
  %2143 = vdwg.mxu0
  %v2144 = vmax.f32 %v2138, 0.0
  %v2145 = vmax.f32 %v2140, 0.0
  %v2146 = vpack.c.bf16 %v2144, %v2144
  %v2147 = vpack.c.bf16 %v2145, %v2145
  %v2148 = vld [vmem:[%s9] sm:$0xf]
  %v2149 = vld [vmem:[%s9 + $0x4] sm:$0xf]
  %v2150 = vld [vmem:[%s9 + $0x8] sm:$0xf]
  %v2151 = vld [vmem:[%s9 + $0xc] sm:$0xf]
  %v2152 = vld [vmem:[%s9 + $0x10] sm:$0xf]
  %v2153 = vld [vmem:[%s9 + $0x14] sm:$0xf]
  %v2154 = vld [vmem:[%s9 + $0x18] sm:$0xf]
  %v2155 = vld [vmem:[%s9 + $0x1c] sm:$0xf]
  %v2156 = vld [vmem:[%s9 + $0x20] sm:$0xf]
  %v2157 = vld [vmem:[%s9 + $0x24] sm:$0xf]
  %v2158 = vld [vmem:[%s9 + $0x28] sm:$0xf]
  %v2159 = vld [vmem:[%s9 + $0x2c] sm:$0xf]
  %v2160 = vld [vmem:[%s9 + $0x30] sm:$0xf]
  %v2161 = vld [vmem:[%s9 + $0x34] sm:$0xf]
  %v2162 = vld [vmem:[%s9 + $0x38] sm:$0xf]
  %v2163 = vld [vmem:[%s9 + $0x3c] sm:$0xf]
  %v2164 = vld [vmem:[%s9 + $0x40] sm:$0xf]
  %v2165 = vld [vmem:[%s9 + $0x44] sm:$0xf]
  %v2166 = vld [vmem:[%s9 + $0x48] sm:$0xf]
  %v2167 = vld [vmem:[%s9 + $0x4c] sm:$0xf]
  %v2168 = vld [vmem:[%s9 + $0x50] sm:$0xf]
  %v2169 = vld [vmem:[%s9 + $0x54] sm:$0xf]
  %v2170 = vld [vmem:[%s9 + $0x58] sm:$0xf]
  %v2171 = vld [vmem:[%s9 + $0x5c] sm:$0xf]
  %v2172 = vld [vmem:[%s9 + $0x60] sm:$0xf]
  %v2173 = vld [vmem:[%s9 + $0x64] sm:$0xf]
  %v2174 = vld [vmem:[%s9 + $0x68] sm:$0xf]
  %v2175 = vld [vmem:[%s9 + $0x6c] sm:$0xf]
  %v2176 = vld [vmem:[%s9 + $0x70] sm:$0xf]
  %v2177 = vld [vmem:[%s9 + $0x74] sm:$0xf]
  %v2178 = vld [vmem:[%s9 + $0x78] sm:$0xf]
  %v2179 = vld [vmem:[%s9 + $0x7c] sm:$0xf]
  %s2180 = sld [smem:[#allocation2]]
  %v2181 = vstv %s2180
  %v2214 = vunpack.c.l.b16 %v2148
  %v2215 = vunpack.c.l.b16 %v2149
  %v2216 = vunpack.c.l.b16 %v2150
  %v2217 = vunpack.c.l.b16 %v2151
  %v2218 = vunpack.c.l.b16 %v2152
  %v2219 = vunpack.c.l.b16 %v2153
  %v2220 = vunpack.c.l.b16 %v2154
  %v2221 = vunpack.c.l.b16 %v2155
  %v2222 = vunpack.c.l.b16 %v2156
  %v2223 = vunpack.c.l.b16 %v2157
  %v2224 = vunpack.c.l.b16 %v2158
  %v2225 = vunpack.c.l.b16 %v2159
  %v2226 = vunpack.c.l.b16 %v2160
  %v2227 = vunpack.c.l.b16 %v2161
  %v2228 = vunpack.c.l.b16 %v2162
  %v2229 = vunpack.c.l.b16 %v2163
  %v2230 = vunpack.c.l.b16 %v2164
  %v2231 = vunpack.c.l.b16 %v2165
  %v2232 = vunpack.c.l.b16 %v2166
  %v2233 = vunpack.c.l.b16 %v2167
  %v2234 = vunpack.c.l.b16 %v2168
  %v2235 = vunpack.c.l.b16 %v2169
  %v2236 = vunpack.c.l.b16 %v2170
  %v2237 = vunpack.c.l.b16 %v2171
  %v2238 = vunpack.c.l.b16 %v2172
  %v2239 = vunpack.c.l.b16 %v2173
  %v2240 = vunpack.c.l.b16 %v2174
  %v2241 = vunpack.c.l.b16 %v2175
  %v2242 = vunpack.c.l.b16 %v2176
  %v2243 = vunpack.c.l.b16 %v2177
  %v2244 = vunpack.c.l.b16 %v2178
  %v2245 = vunpack.c.l.b16 %v2179
  %v2246 = vpack.c.b16 %v2215, %v2214
  %v2247 = vpack.c.b16 %v2217, %v2216
  %v2248 = vpack.c.b16 %v2219, %v2218
  %v2249 = vpack.c.b16 %v2221, %v2220
  %v2250 = vpack.c.b16 %v2223, %v2222
  %v2251 = vpack.c.b16 %v2225, %v2224
  %v2252 = vpack.c.b16 %v2227, %v2226
  %v2253 = vpack.c.b16 %v2229, %v2228
  %v2254 = vpack.c.b16 %v2231, %v2230
  %v2255 = vpack.c.b16 %v2233, %v2232
  %v2256 = vpack.c.b16 %v2235, %v2234
  %v2257 = vpack.c.b16 %v2237, %v2236
  %v2258 = vpack.c.b16 %v2239, %v2238
  %v2259 = vpack.c.b16 %v2241, %v2240
  %v2260 = vpack.c.b16 %v2243, %v2242
  %v2261 = vpack.c.b16 %v2245, %v2244
  %2278 = vmatprep.subr.bf16.mxu0 0
  %2279 = vmatpush1.bf16.msra.mxu0 %v2246
  %2280 = vmatprep.subr.bf16.mxu0 0
  %2281 = vmatpush1.bf16.msra.mxu0 %v2247
  %2282 = vmatprep.subr.bf16.mxu0 0
  %2283 = vmatpush1.bf16.msra.mxu0 %v2248
  %2284 = vmatprep.subr.bf16.mxu0 0
  %2285 = vmatpush1.bf16.msra.mxu0 %v2249
  %2286 = vmatprep.subr.bf16.mxu0 0
  %2287 = vmatpush1.bf16.msra.mxu0 %v2250
  %2288 = vmatprep.subr.bf16.mxu0 0
  %2289 = vmatpush1.bf16.msra.mxu0 %v2251
  %2290 = vmatprep.subr.bf16.mxu0 0
  %2291 = vmatpush1.bf16.msra.mxu0 %v2252
  %2292 = vmatprep.subr.bf16.mxu0 0
  %2293 = vmatpush1.bf16.msra.mxu0 %v2253
  %2294 = vmatprep.subr.bf16.mxu0 0
  %2295 = vmatpush1.bf16.msra.mxu0 %v2254
  %2296 = vmatprep.subr.bf16.mxu0 0
  %2297 = vmatpush1.bf16.msra.mxu0 %v2255
  %2298 = vmatprep.subr.bf16.mxu0 0
  %2299 = vmatpush1.bf16.msra.mxu0 %v2256
  %2300 = vmatprep.subr.bf16.mxu0 0
  %2301 = vmatpush1.bf16.msra.mxu0 %v2257
  %2302 = vmatprep.subr.bf16.mxu0 0
  %2303 = vmatpush1.bf16.msra.mxu0 %v2258
  %2304 = vmatprep.subr.bf16.mxu0 0
  %2305 = vmatpush1.bf16.msra.mxu0 %v2259
  %2306 = vmatprep.subr.bf16.mxu0 0
  %2307 = vmatpush1.bf16.msra.mxu0 %v2260
  %2308 = vmatprep.subr.bf16.mxu0 0
  %2309 = vmatpush1.bf16.msra.mxu0 %v2261
  %2310 = vmatprep.mubr.bf16.mxu0 %v2147
  %2311 = vmatmul.mubr.bf16.gmra.mrb[0].mxu0 %v2146
  %v2312 = vpop.f32.mrb[0].mxu0
  %v2313 = vadd.f32 %v2181, %v2312
  %v2314 = vpop.f32.mrb[0].mxu0
  %v2315 = vpop.f32.mrb[0].mxu0
  %v2316 = vpop.f32.mrb[0].mxu0
  %2317 = vdwg.mxu0
  %vm2318 = vcmask 7168
  %2319 = vst.msk [vmem:[%s11] sm:$0xff] %vm2318, %v2313
  // Predicated region
  $region46: #{auction_net_forward.1} parent=0 // pred_check
    _
  $region47: #{auction_net_forward.1} parent=0 // pred_check_branch
    %2321 = sbr.rel (0) target = $region49
  $region48: #{auction_net_forward.1} parent=0 // pred_region
    _
  $region49: #{auction_net_forward.1} parent=0 // pred_fallthru
    _
  // Predicated region
  $region50: #{auction_net_forward.1} parent=0 // pred_check
    _
  $region51: #{auction_net_forward.1} parent=0 // pred_check_branch
    %2323 = sbr.rel (0) target = $region53
  $region52: #{auction_net_forward.1} parent=0 // pred_region
    _
  $region53: #{auction_net_forward.1} parent=0 // pred_fallthru
    _

</llo_original>
